<compile_context>
chip_gen: v7x
topology: tpu7x:2x2x1
jax: 0.10.0
libtpu: 0.0.40
codegen_flags: <defaults>
</compile_context>

<pallas_src>
import functools
import math

import jax
import jax.numpy as jnp
from jax.experimental import pallas as pl
from jax.experimental.pallas import tpu as pltpu

# Raise the scoped-VMEM default (16/32 MiB) while staying <= physical VMEM on v5e/v6e/v7x.
_VMEM_LIMIT = 64 * 1024 * 1024


# ---------------------------------------------------------------------------
# Pallas kernels (NHWC, channels ride the lane dimension)
# ---------------------------------------------------------------------------

def _conv3x3_kernel(x_ref, w_ref, b_ref, o_ref):
    """3x3, stride-1, pad-1 conv for one batch element.

    x_ref: (1, H+2, W+2, Cin) spatially pre-padded input (NHWC)
    w_ref: (3, 3, Cin, Cout) HWIO weights; b_ref: (1, Cout); o_ref: (1, H, W, Cout)
    """
    _, H, W, Cout = o_ref.shape
    Cin = x_ref.shape[-1]
    x = x_ref[...]            # (1, H+2, W+2, Cin); keep input dtype for the MXU
    w = w_ref[...]            # (3, 3, Cin, Cout)
    acc = jnp.zeros((H * W, Cout), jnp.float32)
    for kh in range(3):       # 9 taps, short static unroll; M = H*W per matmul
        for kw in range(3):
            patch = x[0, kh:kh + H, kw:kw + W, :].reshape(H * W, Cin)
            acc = acc + jnp.dot(patch, w[kh, kw],
                                preferred_element_type=jnp.float32)
    acc = acc + b_ref[...].astype(jnp.float32)     # bias broadcast hoisted (once)
    o_ref[...] = acc.reshape(1, H, W, Cout).astype(o_ref.dtype)


def _conv1x1_kernel(x_ref, w_ref, b_ref, o_ref):
    """1x1 conv (channel mixing) for one batch element: a single matmul."""
    _, H, W, Cout = o_ref.shape
    Cin = x_ref.shape[-1]
    x2 = x_ref[...].reshape(H * W, Cin)
    y = jnp.dot(x2, w_ref[...], preferred_element_type=jnp.float32)
    y = y + b_ref[...].astype(jnp.float32)
    o_ref[...] = y.reshape(1, H, W, Cout).astype(o_ref.dtype)


def _gn_kernel(x_ref, gamma_ref, beta_ref, gmat_ref, o_ref, *, eps, apply_silu):
    """GroupNorm (affine) with optionally fused SiLU for one batch element.

    x_ref: (1, H, W, C); gamma/beta: (1, C); gmat: (C, C) block-diagonal matrix with
    entries 1/(H*W*Cg) inside each group -> per-channel group means via one tiny matmul
    (no lane-subrange slicing, no per-group python loop).
    """
    _, H, W, C = x_ref.shape
    x = x_ref[...].astype(jnp.float32).reshape(H * W, C)
    gmat = gmat_ref[...]
    s = jnp.sum(x, axis=0, keepdims=True)              # (1, C) per-channel spatial sum
    ss = jnp.sum(x * x, axis=0, keepdims=True)         # (1, C) per-channel sum of squares
    mean = jnp.dot(s, gmat, preferred_element_type=jnp.float32)   # per-channel group mean
    ex2 = jnp.dot(ss, gmat, preferred_element_type=jnp.float32)   # per-channel group E[x^2]
    var = ex2 - mean * mean
    inv = jax.lax.rsqrt(var + eps)
    y = (x - mean) * inv
    y = y * gamma_ref[...].astype(jnp.float32) + beta_ref[...].astype(jnp.float32)
    if apply_silu:
        y = y * jax.nn.sigmoid(y)
    o_ref[...] = y.reshape(1, H, W, C).astype(o_ref.dtype)


def _attn_kernel(xn_ref, res_ref, wq_ref, bq_ref, wk_ref, bk_ref, wv_ref, bv_ref,
                 wp_ref, bp_ref, o_ref, *, scale):
    """Single-head attention block body (Decoder uses num_heads == 1) + residual add.

    xn_ref: (1, S, C) group-normalized tokens; res_ref: (1, S, C) residual input.
    Weight refs are (C, C) pre-transposed to (in, out); biases are (1, C).
    """
    _, S, C = xn_ref.shape
    x = xn_ref[...].astype(jnp.float32).reshape(S, C)
    q = jnp.dot(x, wq_ref[...], preferred_element_type=jnp.float32) + bq_ref[...].astype(jnp.float32)
    k = jnp.dot(x, wk_ref[...], preferred_element_type=jnp.float32) + bk_ref[...].astype(jnp.float32)
    v = jnp.dot(x, wv_ref[...], preferred_element_type=jnp.float32) + bv_ref[...].astype(jnp.float32)
    # scores = scale * q @ k^T  (contract last dims; no explicit transpose needed)
    scores = jax.lax.dot_general(q, k, (((1,), (1,)), ((), ())),
                                 preferred_element_type=jnp.float32) * scale
    m = jnp.max(scores, axis=-1, keepdims=True)
    e = jnp.exp(scores - m)
    probs = e / jnp.sum(e, axis=-1, keepdims=True)
    attn = jnp.dot(probs, v, preferred_element_type=jnp.float32)
    out = jnp.dot(attn, wp_ref[...], preferred_element_type=jnp.float32) + bp_ref[...].astype(jnp.float32)
    out = out + res_ref[...].astype(jnp.float32).reshape(S, C)
    o_ref[...] = out.reshape(1, S, C).astype(o_ref.dtype)


# ---------------------------------------------------------------------------
# Pallas wrappers (NHWC)
# ---------------------------------------------------------------------------

def _compiler_params():
    return pltpu.CompilerParams(dimension_semantics=("parallel",),
                                vmem_limit_bytes=_VMEM_LIMIT)


def conv3x3_nhwc(x, w_oihw, b):
    """x: (N, H, W, Cin) -> (N, H, W, Cout). 3x3 conv, stride 1, padding 1."""
    N, H, W, Cin = x.shape
    Cout = w_oihw.shape[0]
    xp = jnp.pad(x, ((0, 0), (1, 1), (1, 1), (0, 0)))       # symmetric pad=1
    w_hwio = jnp.transpose(w_oihw, (2, 3, 1, 0))            # OIHW -> HWIO
    b2 = b.reshape(1, Cout)
    return pl.pallas_call(
        _conv3x3_kernel,
        out_shape=jax.ShapeDtypeStruct((N, H, W, Cout), x.dtype),
        grid_spec=pltpu.PrefetchScalarGridSpec(
            num_scalar_prefetch=0,
            grid=(N,),
            in_specs=[
                pl.BlockSpec((1, H + 2, W + 2, Cin), lambda n: (n, 0, 0, 0)),
                pl.BlockSpec((3, 3, Cin, Cout), lambda n: (0, 0, 0, 0)),
                pl.BlockSpec((1, Cout), lambda n: (0, 0)),
            ],
            out_specs=pl.BlockSpec((1, H, W, Cout), lambda n: (n, 0, 0, 0)),
        ),
        compiler_params=_compiler_params(),
    )(xp, w_hwio, b2)


def conv1x1_nhwc(x, w_oihw, b):
    """x: (N, H, W, Cin) -> (N, H, W, Cout). 1x1 conv (nin_shortcut)."""
    N, H, W, Cin = x.shape
    Cout = w_oihw.shape[0]
    w_io = jnp.transpose(w_oihw.reshape(Cout, Cin))          # (Cin, Cout)
    b2 = b.reshape(1, Cout)
    return pl.pallas_call(
        _conv1x1_kernel,
        out_shape=jax.ShapeDtypeStruct((N, H, W, Cout), x.dtype),
        grid_spec=pltpu.PrefetchScalarGridSpec(
            num_scalar_prefetch=0,
            grid=(N,),
            in_specs=[
                pl.BlockSpec((1, H, W, Cin), lambda n: (n, 0, 0, 0)),
                pl.BlockSpec((Cin, Cout), lambda n: (0, 0)),
                pl.BlockSpec((1, Cout), lambda n: (0, 0)),
            ],
            out_specs=pl.BlockSpec((1, H, W, Cout), lambda n: (n, 0, 0, 0)),
        ),
        compiler_params=_compiler_params(),
    )(x, w_io, b2)


def _group_avg_matrix(C, num_groups, hw):
    cg = C // num_groups
    gid = jnp.arange(C) // cg
    return (gid[:, None] == gid[None, :]).astype(jnp.float32) / float(hw * cg)


def group_norm_nhwc(x, gamma, beta, *, num_groups, eps, apply_silu):
    """GroupNorm(affine) over NHWC, optionally fused with SiLU."""
    N, H, W, C = x.shape
    gmat = _group_avg_matrix(C, num_groups, H * W)
    g2 = gamma.reshape(1, C).astype(jnp.float32)
    b2 = beta.reshape(1, C).astype(jnp.float32)
    kern = functools.partial(_gn_kernel, eps=float(eps), apply_silu=apply_silu)
    return pl.pallas_call(
        kern,
        out_shape=jax.ShapeDtypeStruct((N, H, W, C), x.dtype),
        grid_spec=pltpu.PrefetchScalarGridSpec(
            num_scalar_prefetch=0,
            grid=(N,),
            in_specs=[
                pl.BlockSpec((1, H, W, C), lambda n: (n, 0, 0, 0)),
                pl.BlockSpec((1, C), lambda n: (0, 0)),
                pl.BlockSpec((1, C), lambda n: (0, 0)),
                pl.BlockSpec((C, C), lambda n: (0, 0)),
            ],
            out_specs=pl.BlockSpec((1, H, W, C), lambda n: (n, 0, 0, 0)),
        ),
        compiler_params=_compiler_params(),
    )(x, g2, b2, gmat)


def attention_block_nhwc(x, p, *, num_groups, eps):
    """AttentionBlock forward (num_heads == 1): GN -> qkv -> softmax attn -> proj -> +res."""
    N, H, W, C = x.shape
    xn = group_norm_nhwc(x, *p["norm"], num_groups=num_groups, eps=eps, apply_silu=False)
    S = H * W
    xn_t = xn.reshape(N, S, C)
    res_t = x.reshape(N, S, C)

    def tw(wb):  # torch Linear weight (out, in) -> (in, out); bias -> (1, out)
        w, b = wb
        return jnp.transpose(w), b.reshape(1, -1)

    wq, bq = tw(p["to_q"])
    wk, bk = tw(p["to_k"])
    wv, bv = tw(p["to_v"])
    wp, bp = tw(p["proj"])
    scale = 1.0 / math.sqrt(C)   # num_heads == 1 in the Decoder
    kern = functools.partial(_attn_kernel, scale=scale)

    tok_spec = pl.BlockSpec((1, S, C), lambda n: (n, 0, 0))
    w_spec = pl.BlockSpec((C, C), lambda n: (0, 0))
    b_spec = pl.BlockSpec((1, C), lambda n: (0, 0))

    out = pl.pallas_call(
        kern,
        out_shape=jax.ShapeDtypeStruct((N, S, C), x.dtype),
        grid_spec=pltpu.PrefetchScalarGridSpec(
            num_scalar_prefetch=0,
            grid=(N,),
            in_specs=[tok_spec, tok_spec,
                      w_spec, b_spec, w_spec, b_spec,
                      w_spec, b_spec, w_spec, b_spec],
            out_specs=tok_spec,
        ),
        compiler_params=_compiler_params(),
    )(xn_t, res_t, wq, bq, wk, bk, wv, bv, wp, bp)
    return out.reshape(N, H, W, C)


def resblock_nhwc(x, p, *, num_groups, eps):
    h = group_norm_nhwc(x, *p["norm1"], num_groups=num_groups, eps=eps, apply_silu=True)
    h = conv3x3_nhwc(h, *p["conv1"])
    h = group_norm_nhwc(h, *p["norm2"], num_groups=num_groups, eps=eps, apply_silu=True)
    h = conv3x3_nhwc(h, *p["conv2"])
    if p["nin"] is not None:
        x = conv1x1_nhwc(x, *p["nin"])
    return x + h


def upsample_nhwc(x, conv_wb):
    # nearest 2x upsample (F.interpolate mode='nearest'); tiny glue op, then conv3x3.
    x = jnp.repeat(jnp.repeat(x, 2, axis=1), 2, axis=2)
    return conv3x3_nhwc(x, *conv_wb)


# ---------------------------------------------------------------------------
# Decoder forward (Pallas path, NHWC internally)
# ---------------------------------------------------------------------------

def decoder_pallas(x_nchw, params, cfg):
    G, eps = cfg["norm_num_groups"], cfg["norm_eps"]
    x = jnp.transpose(x_nchw, (0, 2, 3, 1))                    # NCHW -> NHWC once
    x = conv3x3_nhwc(x, *params["conv_in"])
    if cfg["with_nonlocal_attn"]:
        x = resblock_nhwc(x, params["mid_res1"], num_groups=G, eps=eps)
        x = attention_block_nhwc(x, params["mid_attn"], num_groups=G, eps=eps)
        x = resblock_nhwc(x, params["mid_res2"], num_groups=G, eps=eps)
    for level in params["levels"]:
        for rb, at in zip(level["res"], level["attn"]):
            x = resblock_nhwc(x, rb, num_groups=G, eps=eps)
            if at is not None:
                x = attention_block_nhwc(x, at, num_groups=G, eps=eps)
        if level["upsample"] is not None:
            x = upsample_nhwc(x, level["upsample"])
    x = group_norm_nhwc(x, *params["norm_out"], num_groups=G, eps=eps, apply_silu=False)
    x = conv3x3_nhwc(x, *params["conv_out"])
    return jnp.transpose(x, (0, 3, 1, 2))                      # NHWC -> NCHW once


# ---------------------------------------------------------------------------
# Parameter construction (mirrors the PyTorch constructor bookkeeping)
# ---------------------------------------------------------------------------

def _conv_params(key, cin, cout, k):
    fan_in = cin * k * k
    bound = 1.0 / math.sqrt(fan_in)
    kw_, kb_ = jax.random.split(key)
    w = jax.random.uniform(kw_, (cout, cin, k, k), jnp.float32, -bound, bound)
    b = jax.random.uniform(kb_, (cout,), jnp.float32, -bound, bound)
    return w, b


def _linear_params(key, cin, cout):
    bound = 1.0 / math.sqrt(cin)
    kw_, kb_ = jax.random.split(key)
    w = jax.random.uniform(kw_, (cout, cin), jnp.float32, -bound, bound)   # torch (out, in)
    b = jax.random.uniform(kb_, (cout,), jnp.float32, -bound, bound)
    return w, b


def _gn_params(key, c):
    kg, kb = jax.random.split(key)
    g = 1.0 + 0.1 * jax.random.normal(kg, (c,), jnp.float32)
    b = 0.1 * jax.random.normal(kb, (c,), jnp.float32)
    return g, b


def _resblock_params(key, cin, cout):
    k1, k2, k3, k4, k5 = jax.random.split(key, 5)
    return {
        "norm1": _gn_params(k1, cin),
        "conv1": _conv_params(k2, cin, cout, 3),
        "norm2": _gn_params(k3, cout),
        "conv2": _conv_params(k4, cout, cout, 3),
        "nin": _conv_params(k5, cin, cout, 1) if cin != cout else None,
    }


def _attn_params(key, c):
    k1, k2, k3, k4, k5 = jax.random.split(key, 5)
    return {
        "norm": _gn_params(k1, c),
        "to_q": _linear_params(k2, c, c),
        "to_k": _linear_params(k3, c, c),
        "to_v": _linear_params(k4, c, c),
        "proj": _linear_params(k5, c, c),
    }


def init_decoder_params(key, cfg):
    num_channels = cfg["num_channels"]
    reversed_ch = list(reversed(num_channels))
    reversed_attn = list(reversed(cfg["attention_levels"]))
    reversed_nrb = list(reversed(cfg["num_res_blocks"]))
    keys = iter(jax.random.split(key, 128))
    nk = lambda: next(keys)

    params = {"conv_in": _conv_params(nk(), cfg["in_channels"], reversed_ch[0], 3)}
    if cfg["with_nonlocal_attn"]:
        params["mid_res1"] = _resblock_params(nk(), reversed_ch[0], reversed_ch[0])
        params["mid_attn"] = _attn_params(nk(), reversed_ch[0])
        params["mid_res2"] = _resblock_params(nk(), reversed_ch[0], reversed_ch[0])

    levels = []
    block_out = reversed_ch[0]
    for i in range(len(reversed_ch)):
        block_in = block_out
        block_out = reversed_ch[i]
        is_final = i == len(num_channels) - 1
        res, attn = [], []
        for _ in range(reversed_nrb[i]):
            res.append(_resblock_params(nk(), block_in, block_out))
            block_in = block_out
            attn.append(_attn_params(nk(), block_in) if reversed_attn[i] else None)
        up = _conv_params(nk(), block_in, block_in, 3) if not is_final else None
        levels.append({"res": res, "attn": attn, "upsample": up})
    params["levels"] = levels
    params["norm_out"] = _gn_params(nk(), block_in)
    params["conv_out"] = _conv_params(nk(), block_in, cfg["out_channels"], 3)
    return params


# ---------------------------------------------------------------------------
# Pure-JAX reference of the same forward pass (NCHW, for correctness check)
# ---------------------------------------------------------------------------

def _ref_conv(x, w, b, pad):
    out = jax.lax.conv_general_dilated(
        x, w, window_strides=(1, 1), padding=((pad, pad), (pad, pad)),
        dimension_numbers=("NCHW", "OIHW", "NCHW"))
    return out + b.reshape(1, -1, 1, 1)


def _ref_groupnorm(x, g, b, G, eps):
    N, C, H, W = x.shape
    xr = x.reshape(N, G, C // G, H, W)
    mean = jnp.mean(xr, axis=(2, 3, 4), keepdims=True)
    var = jnp.var(xr, axis=(2, 3, 4), keepdims=True)
    xn = ((xr - mean) / jnp.sqrt(var + eps)).reshape(N, C, H, W)
    return xn * g.reshape(1, C, 1, 1) + b.reshape(1, C, 1, 1)


def _ref_silu(x):
    return x * jax.nn.sigmoid(x)


def _ref_resblock(x, p, G, eps):
    h = _ref_silu(_ref_groupnorm(x, *p["norm1"], G, eps))
    h = _ref_conv(h, *p["conv1"], 1)
    h = _ref_silu(_ref_groupnorm(h, *p["norm2"], G, eps))
    h = _ref_conv(h, *p["conv2"], 1)
    if p["nin"] is not None:
        x = _ref_conv(x, *p["nin"], 0)
    return x + h


def _ref_attention(x, p, G, eps):
    N, C, H, W = x.shape
    res = x
    xn = _ref_groupnorm(x, *p["norm"], G, eps)
    t = jnp.transpose(xn.reshape(N, C, H * W), (0, 2, 1))     # (N, S, C)

    def lin(t, wb):
        w, b = wb
        return t @ w.T + b

    q, k, v = lin(t, p["to_q"]), lin(t, p["to_k"]), lin(t, p["to_v"])
    scale = 1.0 / math.sqrt(C)
    scores = jnp.einsum("nsc,ntc->nst", q, k) * scale
    probs = jax.nn.softmax(scores, axis=-1)
    a = jnp.einsum("nst,ntc->nsc", probs, v)
    out = lin(a, p["proj"])
    out = jnp.transpose(out, (0, 2, 1)).reshape(N, C, H, W)
    return out + res


def _ref_upsample(x, conv_wb):
    x = jnp.repeat(jnp.repeat(x, 2, axis=2), 2, axis=3)
    return _ref_conv(x, *conv_wb, 1)


def decoder_ref(x, params, cfg):
    G, eps = cfg["norm_num_groups"], cfg["norm_eps"]
    x = _ref_conv(x, *params["conv_in"], 1)
    if cfg["with_nonlocal_attn"]:
        x = _ref_resblock(x, params["mid_res1"], G, eps)
        x = _ref_attention(x, params["mid_attn"], G, eps)
        x = _ref_resblock(x, params["mid_res2"], G, eps)
    for level in params["levels"]:
        for rb, at in zip(level["res"], level["attn"]):
            x = _ref_resblock(x, rb, G, eps)
            if at is not None:
                x = _ref_attention(x, at, G, eps)
        if level["upsample"] is not None:
            x = _ref_upsample(x, level["upsample"])
    x = _ref_groupnorm(x, *params["norm_out"], G, eps)
    x = _ref_conv(x, *params["conv_out"], 1)
    return x


# ---------------------------------------------------------------------------
# Test
# ---------------------------------------------------------------------------

if __name__ == "__main__":
    cfg = dict(
        spatial_dims=2,
        num_channels=(32, 64),
        in_channels=4,
        out_channels=3,
        num_res_blocks=(1, 1),
        norm_num_groups=8,
        norm_eps=1e-6,
        attention_levels=(False, False),
        with_nonlocal_attn=True,
    )
    key = jax.random.PRNGKey(0)
    kp, kx = jax.random.split(key)
    params = init_decoder_params(kp, cfg)

    N, H, W = 2, 8, 8                       # small latent: (N, in_channels, 8, 8)
    x = jax.random.normal(kx, (N, cfg["in_channels"], H, W), jnp.float32)

    out = jax.block_until_ready(decoder_pallas(x, params, cfg))
    ref = jax.block_until_ready(decoder_ref(x, params, cfg))

    assert out.shape == (N, cfg["out_channels"], H * 2, W * 2), out.shape
    err = float(jnp.max(jnp.abs(out - ref)))
    assert err < 1e-3, f"max abs diff {err}"
    print("KERNEL_OK")
</pallas_src>

<mosaic_0001>
module attributes {stable_mosaic.version = 11 : i64} {
  func.func @_conv3x3_kernel(%arg0: i32, %arg1: memref<1x10x10x4xf32, #tpu.memory_space<vmem>>, %arg2: memref<3x3x4x64xf32, #tpu.memory_space<vmem>>, %arg3: memref<1x64xf32, #tpu.memory_space<vmem>>, %arg4: memref<1x8x8x64xf32, #tpu.memory_space<vmem>>) attributes {dimension_semantics = [#tpu.dimension_semantics<parallel>], iteration_bounds = array<i64: 2>, scalar_prefetch = 0 : i64, scratch_operands = 0 : i64, tpu.core_type = #tpu.core_type<tc>, window_params = [{transform_indices = @transform_0, window_bounds = array<i64: 1, 10, 10, 4>}, {pipeline_mode = #tpu.pipeline_mode<synchronous>, transform_indices = @transform_1, window_bounds = array<i64: 3, 3, 4, 64>}, {pipeline_mode = #tpu.pipeline_mode<synchronous>, transform_indices = @transform_2, window_bounds = array<i64: 1, 64>}, {transform_indices = @transform_3, window_bounds = array<i64: 1, 8, 8, 64>}]} {
    %c0 = arith.constant 0 : index
    %c0_0 = arith.constant 0 : index
    %c0_1 = arith.constant 0 : index
    %c0_2 = arith.constant 0 : index
    %0 = vector.load %arg1[%c0, %c0_0, %c0_1, %c0_2] : memref<1x10x10x4xf32, #tpu.memory_space<vmem>>, vector<1x10x10x4xf32>
    %c0_3 = arith.constant 0 : index
    %c0_4 = arith.constant 0 : index
    %c0_5 = arith.constant 0 : index
    %c0_6 = arith.constant 0 : index
    %1 = vector.load %arg2[%c0_3, %c0_4, %c0_5, %c0_6] : memref<3x3x4x64xf32, #tpu.memory_space<vmem>>, vector<3x3x4x64xf32>
    %cst = arith.constant 0.000000e+00 : f32
    %2 = vector.broadcast %cst : f32 to vector<64x64xf32>
    %3 = vector.extract_strided_slice %0 {offsets = [0, 0, 0, 0], sizes = [1, 8, 8, 4], strides = [1, 1, 1, 1]} : vector<1x10x10x4xf32> to vector<1x8x8x4xf32>
    %4 = vector.shape_cast %3 : vector<1x8x8x4xf32> to vector<8x8x4xf32>
    %5 = vector.shape_cast %4 : vector<8x8x4xf32> to vector<64x4xf32>
    %6 = vector.extract_strided_slice %1 {offsets = [0, 0, 0, 0], sizes = [1, 1, 4, 64], strides = [1, 1, 1, 1]} : vector<3x3x4x64xf32> to vector<1x1x4x64xf32>
    %7 = vector.shape_cast %6 : vector<1x1x4x64xf32> to vector<4x64xf32>
    %cst_7 = arith.constant dense<0.000000e+00> : vector<64x64xf32>
    %8 = tpu.matmul %5, %7, %cst_7 {dimension_numbers = #tpu.dot_dimension_numbers<[1], [0], [0], [1], [0, 0, 1, 1], [], []>} : vector<64x4xf32>, vector<4x64xf32>, vector<64x64xf32> -> vector<64x64xf32>
    %9 = arith.addf %2, %8 : vector<64x64xf32>
    %10 = vector.extract_strided_slice %0 {offsets = [0, 0, 1, 0], sizes = [1, 8, 8, 4], strides = [1, 1, 1, 1]} : vector<1x10x10x4xf32> to vector<1x8x8x4xf32>
    %11 = vector.shape_cast %10 : vector<1x8x8x4xf32> to vector<8x8x4xf32>
    %12 = vector.shape_cast %11 : vector<8x8x4xf32> to vector<64x4xf32>
    %13 = vector.extract_strided_slice %1 {offsets = [0, 1, 0, 0], sizes = [1, 1, 4, 64], strides = [1, 1, 1, 1]} : vector<3x3x4x64xf32> to vector<1x1x4x64xf32>
    %14 = vector.shape_cast %13 : vector<1x1x4x64xf32> to vector<4x64xf32>
    %cst_8 = arith.constant dense<0.000000e+00> : vector<64x64xf32>
    %15 = tpu.matmul %12, %14, %cst_8 {dimension_numbers = #tpu.dot_dimension_numbers<[1], [0], [0], [1], [0, 0, 1, 1], [], []>} : vector<64x4xf32>, vector<4x64xf32>, vector<64x64xf32> -> vector<64x64xf32>
    %16 = arith.addf %9, %15 : vector<64x64xf32>
    %17 = vector.extract_strided_slice %0 {offsets = [0, 0, 2, 0], sizes = [1, 8, 8, 4], strides = [1, 1, 1, 1]} : vector<1x10x10x4xf32> to vector<1x8x8x4xf32>
    %18 = vector.shape_cast %17 : vector<1x8x8x4xf32> to vector<8x8x4xf32>
    %19 = vector.shape_cast %18 : vector<8x8x4xf32> to vector<64x4xf32>
    %20 = vector.extract_strided_slice %1 {offsets = [0, 2, 0, 0], sizes = [1, 1, 4, 64], strides = [1, 1, 1, 1]} : vector<3x3x4x64xf32> to vector<1x1x4x64xf32>
    %21 = vector.shape_cast %20 : vector<1x1x4x64xf32> to vector<4x64xf32>
    %cst_9 = arith.constant dense<0.000000e+00> : vector<64x64xf32>
    %22 = tpu.matmul %19, %21, %cst_9 {dimension_numbers = #tpu.dot_dimension_numbers<[1], [0], [0], [1], [0, 0, 1, 1], [], []>} : vector<64x4xf32>, vector<4x64xf32>, vector<64x64xf32> -> vector<64x64xf32>
    %23 = arith.addf %16, %22 : vector<64x64xf32>
    %24 = vector.extract_strided_slice %0 {offsets = [0, 1, 0, 0], sizes = [1, 8, 8, 4], strides = [1, 1, 1, 1]} : vector<1x10x10x4xf32> to vector<1x8x8x4xf32>
    %25 = vector.shape_cast %24 : vector<1x8x8x4xf32> to vector<8x8x4xf32>
    %26 = vector.shape_cast %25 : vector<8x8x4xf32> to vector<64x4xf32>
    %27 = vector.extract_strided_slice %1 {offsets = [1, 0, 0, 0], sizes = [1, 1, 4, 64], strides = [1, 1, 1, 1]} : vector<3x3x4x64xf32> to vector<1x1x4x64xf32>
    %28 = vector.shape_cast %27 : vector<1x1x4x64xf32> to vector<4x64xf32>
    %cst_10 = arith.constant dense<0.000000e+00> : vector<64x64xf32>
    %29 = tpu.matmul %26, %28, %cst_10 {dimension_numbers = #tpu.dot_dimension_numbers<[1], [0], [0], [1], [0, 0, 1, 1], [], []>} : vector<64x4xf32>, vector<4x64xf32>, vector<64x64xf32> -> vector<64x64xf32>
    %30 = arith.addf %23, %29 : vector<64x64xf32>
    %31 = vector.extract_strided_slice %0 {offsets = [0, 1, 1, 0], sizes = [1, 8, 8, 4], strides = [1, 1, 1, 1]} : vector<1x10x10x4xf32> to vector<1x8x8x4xf32>
    %32 = vector.shape_cast %31 : vector<1x8x8x4xf32> to vector<8x8x4xf32>
    %33 = vector.shape_cast %32 : vector<8x8x4xf32> to vector<64x4xf32>
    %34 = vector.extract_strided_slice %1 {offsets = [1, 1, 0, 0], sizes = [1, 1, 4, 64], strides = [1, 1, 1, 1]} : vector<3x3x4x64xf32> to vector<1x1x4x64xf32>
    %35 = vector.shape_cast %34 : vector<1x1x4x64xf32> to vector<4x64xf32>
    %cst_11 = arith.constant dense<0.000000e+00> : vector<64x64xf32>
    %36 = tpu.matmul %33, %35, %cst_11 {dimension_numbers = #tpu.dot_dimension_numbers<[1], [0], [0], [1], [0, 0, 1, 1], [], []>} : vector<64x4xf32>, vector<4x64xf32>, vector<64x64xf32> -> vector<64x64xf32>
    %37 = arith.addf %30, %36 : vector<64x64xf32>
    %38 = vector.extract_strided_slice %0 {offsets = [0, 1, 2, 0], sizes = [1, 8, 8, 4], strides = [1, 1, 1, 1]} : vector<1x10x10x4xf32> to vector<1x8x8x4xf32>
    %39 = vector.shape_cast %38 : vector<1x8x8x4xf32> to vector<8x8x4xf32>
    %40 = vector.shape_cast %39 : vector<8x8x4xf32> to vector<64x4xf32>
    %41 = vector.extract_strided_slice %1 {offsets = [1, 2, 0, 0], sizes = [1, 1, 4, 64], strides = [1, 1, 1, 1]} : vector<3x3x4x64xf32> to vector<1x1x4x64xf32>
    %42 = vector.shape_cast %41 : vector<1x1x4x64xf32> to vector<4x64xf32>
    %cst_12 = arith.constant dense<0.000000e+00> : vector<64x64xf32>
    %43 = tpu.matmul %40, %42, %cst_12 {dimension_numbers = #tpu.dot_dimension_numbers<[1], [0], [0], [1], [0, 0, 1, 1], [], []>} : vector<64x4xf32>, vector<4x64xf32>, vector<64x64xf32> -> vector<64x64xf32>
    %44 = arith.addf %37, %43 : vector<64x64xf32>
    %45 = vector.extract_strided_slice %0 {offsets = [0, 2, 0, 0], sizes = [1, 8, 8, 4], strides = [1, 1, 1, 1]} : vector<1x10x10x4xf32> to vector<1x8x8x4xf32>
    %46 = vector.shape_cast %45 : vector<1x8x8x4xf32> to vector<8x8x4xf32>
    %47 = vector.shape_cast %46 : vector<8x8x4xf32> to vector<64x4xf32>
    %48 = vector.extract_strided_slice %1 {offsets = [2, 0, 0, 0], sizes = [1, 1, 4, 64], strides = [1, 1, 1, 1]} : vector<3x3x4x64xf32> to vector<1x1x4x64xf32>
    %49 = vector.shape_cast %48 : vector<1x1x4x64xf32> to vector<4x64xf32>
    %cst_13 = arith.constant dense<0.000000e+00> : vector<64x64xf32>
    %50 = tpu.matmul %47, %49, %cst_13 {dimension_numbers = #tpu.dot_dimension_numbers<[1], [0], [0], [1], [0, 0, 1, 1], [], []>} : vector<64x4xf32>, vector<4x64xf32>, vector<64x64xf32> -> vector<64x64xf32>
    %51 = arith.addf %44, %50 : vector<64x64xf32>
    %52 = vector.extract_strided_slice %0 {offsets = [0, 2, 1, 0], sizes = [1, 8, 8, 4], strides = [1, 1, 1, 1]} : vector<1x10x10x4xf32> to vector<1x8x8x4xf32>
    %53 = vector.shape_cast %52 : vector<1x8x8x4xf32> to vector<8x8x4xf32>
    %54 = vector.shape_cast %53 : vector<8x8x4xf32> to vector<64x4xf32>
    %55 = vector.extract_strided_slice %1 {offsets = [2, 1, 0, 0], sizes = [1, 1, 4, 64], strides = [1, 1, 1, 1]} : vector<3x3x4x64xf32> to vector<1x1x4x64xf32>
    %56 = vector.shape_cast %55 : vector<1x1x4x64xf32> to vector<4x64xf32>
    %cst_14 = arith.constant dense<0.000000e+00> : vector<64x64xf32>
    %57 = tpu.matmul %54, %56, %cst_14 {dimension_numbers = #tpu.dot_dimension_numbers<[1], [0], [0], [1], [0, 0, 1, 1], [], []>} : vector<64x4xf32>, vector<4x64xf32>, vector<64x64xf32> -> vector<64x64xf32>
    %58 = arith.addf %51, %57 : vector<64x64xf32>
    %59 = vector.extract_strided_slice %0 {offsets = [0, 2, 2, 0], sizes = [1, 8, 8, 4], strides = [1, 1, 1, 1]} : vector<1x10x10x4xf32> to vector<1x8x8x4xf32>
    %60 = vector.shape_cast %59 : vector<1x8x8x4xf32> to vector<8x8x4xf32>
    %61 = vector.shape_cast %60 : vector<8x8x4xf32> to vector<64x4xf32>
    %62 = vector.extract_strided_slice %1 {offsets = [2, 2, 0, 0], sizes = [1, 1, 4, 64], strides = [1, 1, 1, 1]} : vector<3x3x4x64xf32> to vector<1x1x4x64xf32>
    %63 = vector.shape_cast %62 : vector<1x1x4x64xf32> to vector<4x64xf32>
    %cst_15 = arith.constant dense<0.000000e+00> : vector<64x64xf32>
    %64 = tpu.matmul %61, %63, %cst_15 {dimension_numbers = #tpu.dot_dimension_numbers<[1], [0], [0], [1], [0, 0, 1, 1], [], []>} : vector<64x4xf32>, vector<4x64xf32>, vector<64x64xf32> -> vector<64x64xf32>
    %65 = arith.addf %58, %64 : vector<64x64xf32>
    %c0_16 = arith.constant 0 : index
    %c0_17 = arith.constant 0 : index
    %66 = vector.load %arg3[%c0_16, %c0_17] : memref<1x64xf32, #tpu.memory_space<vmem>>, vector<1x64xf32>
    %67 = vector.broadcast %66 : vector<1x64xf32> to vector<64x64xf32>
    %68 = arith.addf %65, %67 : vector<64x64xf32>
    %69 = vector.shape_cast %68 : vector<64x64xf32> to vector<1x8x8x64xf32>
    %c0_18 = arith.constant 0 : index
    %c0_19 = arith.constant 0 : index
    %c0_20 = arith.constant 0 : index
    %c0_21 = arith.constant 0 : index
    %70 = vector.load %arg4[%c0_18, %c0_19, %c0_20, %c0_21] : memref<1x8x8x64xf32, #tpu.memory_space<vmem>>, vector<1x8x8x64xf32>
    tpu.vector_store %arg4[%c0_18, %c0_19, %c0_20, %c0_21], %69 {strides = array<i32>} : memref<1x8x8x64xf32, #tpu.memory_space<vmem>>, vector<1x8x8x64xf32>,
    return
  }
  func.func @transform_0(%arg0: i32) -> (i32, i32, i32, i32) {
    %c0_i32 = arith.constant 0 : i32
    %c0_i32_0 = arith.constant 0 : i32
    %c0_i32_1 = arith.constant 0 : i32
    %c0_i32_2 = arith.constant 0 : i32
    return %arg0, %c0_i32, %c0_i32_0, %c0_i32_1 : i32, i32, i32, i32
  }
  func.func @transform_1(%arg0: i32) -> (i32, i32, i32, i32) {
    %c0_i32 = arith.constant 0 : i32
    %c0_i32_0 = arith.constant 0 : i32
    %c0_i32_1 = arith.constant 0 : i32
    %c0_i32_2 = arith.constant 0 : i32
    %c0_i32_3 = arith.constant 0 : i32
    return %c0_i32, %c0_i32_0, %c0_i32_1, %c0_i32_2 : i32, i32, i32, i32
  }
  func.func @transform_2(%arg0: i32) -> (i32, i32) {
    %c0_i32 = arith.constant 0 : i32
    %c0_i32_0 = arith.constant 0 : i32
    %c0_i32_1 = arith.constant 0 : i32
    return %c0_i32, %c0_i32_0 : i32, i32
  }
  func.func @transform_3(%arg0: i32) -> (i32, i32, i32, i32) {
    %c0_i32 = arith.constant 0 : i32
    %c0_i32_0 = arith.constant 0 : i32
    %c0_i32_1 = arith.constant 0 : i32
    %c0_i32_2 = arith.constant 0 : i32
    return %arg0, %c0_i32, %c0_i32_0, %c0_i32_1 : i32, i32, i32, i32
  }
}

</mosaic_0001>

<llo_original>
// kernel: tpu_custom_call.1
$region0: #{tpu_custom_call.1}
  #allocation0 [shape = 'u32[]', space=smem, size = 0x4, offset = 0x4, fixed_abs, tag = 'smem constant byte address 0x4 - core index']
  #allocation1 [shape = 'u32[144,128]{1,0:T(1,128)}', space=vmem, size = 0x12000, scoped, tag = 'internal scratch']
  %s0 = inlined_call_operand.hbm [shape: f32[2,10,10,4], index: 0, kind: input, shape index: {}]
  %s1 = inlined_call_operand.hbm [shape: f32[3,3,4,64], index: 1, kind: input, shape index: {}]
  %s2 = inlined_call_operand.hbm [shape: f32[1,64], index: 2, kind: input, shape index: {}]
  %s3 = inlined_call_operand.hbm [shape: f32[2,8,8,64], index: 3, kind: output, shape index: {}]
  %s4 = sld [smem:[#allocation0]]
  $region57: #{tpu_custom_call.1} parent=0
    _
  %s6 = ssub.s32 1, %s4
  %s7 = scalar_select 0, %s6, %s4
  $region1: #{tpu_custom_call.1} parent=0
    #allocation2 [shape = 'u8[163840]{0}', space=vmem, size = 0x28000, scoped, tag = 'input window, operand 0']
    #allocation3 [shape = 's32[2]{0}', space=sflag, size = 0x8, scoped, tag = 'scoped memory for tpu_custom_call.1']
    #allocation4 [shape = 's32[2]{0}', space=sflag, size = 0x8, scoped, tag = 'scoped memory for tpu_custom_call.1']
    #allocation5 [shape = 'u8[18432]{0}', space=vmem, size = 0x4800, scoped, tag = 'input window, operand 1, single buffered']
    #allocation6 [shape = 's32[1]{0}', space=sflag, size = 0x4, scoped, tag = 'scoped memory for tpu_custom_call.1']
    #allocation7 [shape = 'u8[512]{0}', space=vmem, size = 0x400, scoped, tag = 'input window, operand 2, single buffered']
    #allocation8 [shape = 'u8[65536]{0}', space=vmem, size = 0x10000, scoped, tag = 'output window, operand 0']
    %8 = vsyncpa [#allocation3], 0
    %s9 = scalar_lea.sflag [#allocation3], 1
    %10 = vsyncpa %s9, 0
    %11 = vsyncpa [#allocation6], 0
    %12 = vsyncpa [#allocation4], 0
    %s13 = scalar_lea.sflag [#allocation4], 1
    %14 = vsyncpa %s13, 0
    loop: start=0, step=1, limit=4
    $region2: #{tpu_custom_call.1} parent=1 // loop_pre_header
      _
    $region3: #{tpu_custom_call.1} parent=1 // loop_header
      %s16 = sphi 0, %s20
      %p17 = scmp.ge.s32.totalorder %s16, 4
      %s26 = sphi 0, %s28
      %s29 = sphi 0, %s26
      %s30 = sphi 0, %s29
      %s46 = sphi 0, %s30
      %s50 = sphi 0, %s50
      %s52 = sphi 0, %s50
      %s53 = sphi 0, %s52
      %s67 = sphi 0, %s53
      %s71 = sphi 0, %s71
      %s73 = sphi 0, %s71
      %s74 = sphi 0, %s73
      %s88 = sphi 0, %s74
      %s94 = sphi 0, %s96
      %s97 = sphi 0, %s94
      %s98 = sphi 0, %s97
      %s114 = sphi 0, %s98
    $region4: #{tpu_custom_call.1} parent=1 // loop_header_branch
      %19 = sbr.rel (%p17) target = $region8
    $region5: #{tpu_custom_call.1} parent=1 // loop_body
      %s21 = ssub.s32 %s16, 1
      %s22 = ssub.s32 %s16, 2
      %s23 = sadd.s32 %s16, 1
      %s24 = ssub.s32 %s16, %s23
      %p25 = scmp.eq.s32.totalorder %s24, 0
      %s27 = sadd.s32 %s26, 1
      %s28 = scalar_select %p25, %s26, %s27
      %p31 = pneg %p25
      %p32 = scmp.eq.s32.totalorder %s16, 1
      %p33 = por %p31, %p32
      %p34 = scmp.ne.s32.totalorder %s26, %s29
      %p35 = scmp.eq.s32.totalorder %s16, 0
      %p36 = por %p34, %p35
      %p37 = scmp.ne.s32.totalorder %s26, %s29
      %p38 = scmp.eq.s32.totalorder %s21, 1
      %p39 = por %p37, %p38
      %p40 = scmp.ne.s32.totalorder %s29, %s30
      %p41 = scmp.eq.s32.totalorder %s21, 0
      %p42 = por %p40, %p41
      %p43 = scmp.ne.s32.totalorder %s29, %s30
      %p44 = scmp.eq.s32.totalorder %s22, 1
      %p45 = por %p43, %p44
      %p47 = scmp.ne.s32.totalorder %s30, %s46
      %p48 = scmp.eq.s32.totalorder %s22, 0
      %p49 = por %p47, %p48
      %s51 = sadd.s32 %s50, 1
      %p54 = scmp.eq.s32.totalorder %s16, 1
      %p55 = scmp.ne.s32.totalorder %s50, %s52
      %p56 = scmp.eq.s32.totalorder %s16, 0
      %p57 = por %p55, %p56
      %p58 = scmp.ne.s32.totalorder %s50, %s52
      %p59 = scmp.eq.s32.totalorder %s21, 1
      %p60 = por %p58, %p59
      %p61 = scmp.ne.s32.totalorder %s52, %s53
      %p62 = scmp.eq.s32.totalorder %s21, 0
      %p63 = por %p61, %p62
      %p64 = scmp.ne.s32.totalorder %s52, %s53
      %p65 = scmp.eq.s32.totalorder %s22, 1
      %p66 = por %p64, %p65
      %p68 = scmp.ne.s32.totalorder %s53, %s67
      %p69 = scmp.eq.s32.totalorder %s22, 0
      %p70 = por %p68, %p69
      %s72 = sadd.s32 %s71, 1
      %p75 = scmp.eq.s32.totalorder %s16, 1
      %p76 = scmp.ne.s32.totalorder %s71, %s73
      %p77 = scmp.eq.s32.totalorder %s16, 0
      %p78 = por %p76, %p77
      %p79 = scmp.ne.s32.totalorder %s71, %s73
      %p80 = scmp.eq.s32.totalorder %s21, 1
      %p81 = por %p79, %p80
      %p82 = scmp.ne.s32.totalorder %s73, %s74
      %p83 = scmp.eq.s32.totalorder %s21, 0
      %p84 = por %p82, %p83
      %p85 = scmp.ne.s32.totalorder %s73, %s74
      %p86 = scmp.eq.s32.totalorder %s22, 1
      %p87 = por %p85, %p86
      %p89 = scmp.ne.s32.totalorder %s74, %s88
      %p90 = scmp.eq.s32.totalorder %s22, 0
      %p91 = por %p89, %p90
      %s92 = ssub.s32 %s16, %s23
      %p93 = scmp.eq.s32.totalorder %s92, 0
      %s95 = sadd.s32 %s94, 1
      %s96 = scalar_select %p93, %s94, %s95
      %p99 = pneg %p93
      %p100 = scmp.eq.s32.totalorder %s16, 1
      %p101 = por %p99, %p100
      %p102 = scmp.ne.s32.totalorder %s94, %s97
      %p103 = scmp.eq.s32.totalorder %s16, 0
      %p104 = por %p102, %p103
      %p105 = scmp.ne.s32.totalorder %s94, %s97
      %p106 = scmp.eq.s32.totalorder %s21, 1
      %p107 = por %p105, %p106
      %p108 = scmp.ne.s32.totalorder %s97, %s98
      %p109 = scmp.eq.s32.totalorder %s21, 0
      %p110 = por %p108, %p109
      %p111 = scmp.ne.s32.totalorder %s97, %s98
      %p112 = scmp.eq.s32.totalorder %s22, 1
      %p113 = por %p111, %p112
      %p115 = scmp.ne.s32.totalorder %s98, %s114
      %p116 = scmp.eq.s32.totalorder %s22, 0
      %p117 = por %p115, %p116
      %p118 = scmp.le.s32.totalorder 1, %s16
      %p119 = scmp.lt.s32.totalorder %s16, 3
      %p120 = pnand %p118, %p119
      %p121 = pneg %p120
      // Predicated region
      $region9: #{tpu_custom_call.1} parent=5 // pred_check
        _
      $region10: #{tpu_custom_call.1} parent=5 // pred_check_branch
        %123 = sbr.rel (%p120) target = $region12
      $region11: #{tpu_custom_call.1} parent=5 // pred_region
        %s124 = ssub.s32 %s16, 1
        // Predicated region
        $region13: #{tpu_custom_call.1} parent=11 // pred_check
          %p125 = pneg %p63
        $region14: #{tpu_custom_call.1} parent=11 // pred_check_branch
          %127 = sbr.rel (%p125) target = $region16
        $region15: #{tpu_custom_call.1} parent=11 // pred_region
          %s129 = ssub.s32 576, 576
          %130 = vsyncadd [#allocation6], %s129
          %s131 = sshll.u32 [#allocation5], 4
          %s132 = int_to_ptr.vmem [resolvable:$true] %s131
          %137 = dma.hbm_to_vmem [thread:$0]  %s1, 576, %s132, [#allocation6], 64, 64, 4
        $region16: #{tpu_custom_call.1} parent=11 // pred_fallthru
          _
        // Predicated region
        $region17: #{tpu_custom_call.1} parent=11 // pred_check
          %p138 = pneg %p84
        $region18: #{tpu_custom_call.1} parent=11 // pred_check_branch
          %140 = sbr.rel (%p138) target = $region20
        $region19: #{tpu_custom_call.1} parent=11 // pred_region
          %s142 = ssub.s32 16, 16
          %143 = vsyncadd [#allocation6], %s142
          %s145 = sshll.u32 [#allocation7], 4
          %s146 = int_to_ptr.vmem [resolvable:$true] %s145
          %148 = dma.hbm_to_vmem [thread:$0]  %s2, 16, %s146, [#allocation6]
        $region20: #{tpu_custom_call.1} parent=11 // pred_fallthru
          _
      $region12: #{tpu_custom_call.1} parent=5 // pred_fallthru
        _
      %p149 = scmp.lt.s32.totalorder %s16, 2
      // Predicated region
      $region21: #{tpu_custom_call.1} parent=5 // pred_check
        %p150 = pneg %p149
      $region22: #{tpu_custom_call.1} parent=5 // pred_check_branch
        %152 = sbr.rel (%p150) target = $region24
      $region23: #{tpu_custom_call.1} parent=5 // pred_region
        // Predicated region
        $region25: #{tpu_custom_call.1} parent=23 // pred_check
          %p153 = pneg %p36
        $region26: #{tpu_custom_call.1} parent=23 // pred_check_branch
          %155 = sbr.rel (%p153) target = $region28
        $region27: #{tpu_custom_call.1} parent=23 // pred_region
          %s156 = sand.u32 %s26, 1
          %s157 = scalar_lea.sflag [#allocation3], %s156
          %s158 = sand.u32 %s26, 1
          %s159 = smul.addr %s158, 160
          %s160 = scalar_lea.vmem [#allocation2], %s159
          %s162 = ssub.s32 2560, 2560
          %163 = vsyncadd %s157, %s162
          %s164 = smul.addr %s16, 20
          %s165 = smul.addr %s164, 128
          %s166 = scalar_lea.hbm %s0, %s165
          %s167 = sshll.u32 %s160, 4
          %s168 = int_to_ptr.vmem [resolvable:$true] %s167
          %173 = dma.hbm_to_vmem [thread:$0]  %s166, 2560, %s168, %s157, 128, 128, 8
        $region28: #{tpu_custom_call.1} parent=23 // pred_fallthru
          _
      $region24: #{tpu_custom_call.1} parent=5 // pred_fallthru
        _
      %p174 = scmp.le.s32.totalorder 1, %s16
      %p175 = scmp.lt.s32.totalorder %s16, 3
      %p176 = pnand %p174, %p175
      %p177 = pneg %p176
      // Predicated region
      $region29: #{tpu_custom_call.1} parent=5 // pred_check
        _
      $region30: #{tpu_custom_call.1} parent=5 // pred_check_branch
        %179 = sbr.rel (%p176) target = $region32
      $region31: #{tpu_custom_call.1} parent=5 // pred_region
        %s180 = ssub.s32 %s16, 1
        %s181 = sand.u32 %s29, 1
        %s182 = scalar_lea.sflag [#allocation3], %s181
        %s183 = sand.u32 %s29, 1
        %s184 = smul.addr %s183, 160
        %s185 = scalar_lea.vmem [#allocation2], %s184
        // Predicated region
        $region33: #{tpu_custom_call.1} parent=31 // pred_check
          %p186 = pneg %p42
        $region34: #{tpu_custom_call.1} parent=31 // pred_check_branch
          %188 = sbr.rel (%p186) target = $region36
        $region35: #{tpu_custom_call.1} parent=31 // pred_region
          %189 = dma.done %s182, 2560
        $region36: #{tpu_custom_call.1} parent=31 // pred_fallthru
          _
        // Predicated region
        $region37: #{tpu_custom_call.1} parent=31 // pred_check
          %p190 = pneg %p63
        $region38: #{tpu_custom_call.1} parent=31 // pred_check_branch
          %192 = sbr.rel (%p190) target = $region40
        $region39: #{tpu_custom_call.1} parent=31 // pred_region
          %193 = dma.done [#allocation6], 576
        $region40: #{tpu_custom_call.1} parent=31 // pred_fallthru
          _
        // Predicated region
        $region41: #{tpu_custom_call.1} parent=31 // pred_check
          %p194 = pneg %p84
        $region42: #{tpu_custom_call.1} parent=31 // pred_check_branch
          %196 = sbr.rel (%p194) target = $region44
        $region43: #{tpu_custom_call.1} parent=31 // pred_region
          %197 = dma.done [#allocation6], 16
        $region44: #{tpu_custom_call.1} parent=31 // pred_fallthru
          _
        %s198 = sand.u32 %s29, 1
        %s199 = scalar_lea.sflag [#allocation3], %s198
        %s200 = sand.u32 %s29, 1
        %s201 = smul.addr %s200, 160
        %s202 = scalar_lea.vmem [#allocation2], %s201
        %p203 = pneg %p42
        %p204 = pneg %p39
        %p205 = pneg %p63
        %p206 = pneg %p60
        %p207 = pneg %p84
        %p208 = pneg %p81
        %p209 = pneg %p110
        %p210 = pneg %p107
        %s211 = sand.u32 %s97, 1
        %s212 = scalar_lea.sflag [#allocation4], %s211
        %s213 = sand.u32 %s97, 1
        %s214 = smul.addr %s213, 64
        %s215 = scalar_lea.vmem [#allocation8], %s214
        %v216 = vld [vmem:[%s185] sm:$0xff]
        %v217 = vld [vmem:[%s185 + $0x8] sm:$0x3]
        %v218 = vld [vmem:[%s185 + $0x10] sm:$0xff]
        %v219 = vld [vmem:[%s185 + $0x18] sm:$0x3]
        %v220 = vld [vmem:[%s185 + $0x20] sm:$0xff]
        %v221 = vld [vmem:[%s185 + $0x28] sm:$0x3]
        %v222 = vld [vmem:[%s185 + $0x30] sm:$0xff]
        %v223 = vld [vmem:[%s185 + $0x38] sm:$0x3]
        %v224 = vld [vmem:[%s185 + $0x40] sm:$0xff]
        %v225 = vld [vmem:[%s185 + $0x48] sm:$0x3]
        %v226 = vld [vmem:[%s185 + $0x50] sm:$0xff]
        %v227 = vld [vmem:[%s185 + $0x58] sm:$0x3]
        %v228 = vld [vmem:[%s185 + $0x60] sm:$0xff]
        %v229 = vld [vmem:[%s185 + $0x68] sm:$0x3]
        %v230 = vld [vmem:[%s185 + $0x70] sm:$0xff]
        %v231 = vld [vmem:[%s185 + $0x78] sm:$0x3]
        %v232 = vld [vmem:[%s185 + $0x80] sm:$0xff]
        %v233 = vld [vmem:[%s185 + $0x88] sm:$0x3]
        %v234 = vld [vmem:[%s185 + $0x90] sm:$0xff]
        %v235 = vld [vmem:[%s185 + $0x98] sm:$0x3]
        %v236 = vld [vmem:[#allocation5] sm:$0xf]
        %v237 = vld [vmem:[#allocation5 + $0x4] sm:$0xf]
        %v238 = vld [vmem:[#allocation5 + $0x8] sm:$0xf]
        %v239 = vld [vmem:[#allocation5 + $0xc] sm:$0xf]
        %v240 = vld [vmem:[#allocation5 + $0x10] sm:$0xf]
        %v241 = vld [vmem:[#allocation5 + $0x14] sm:$0xf]
        %v242 = vld [vmem:[#allocation5 + $0x18] sm:$0xf]
        %v243 = vld [vmem:[#allocation5 + $0x1c] sm:$0xf]
        %v244 = vld [vmem:[#allocation5 + $0x20] sm:$0xf]
        %vm261 = vcmask 1046528
        %v262 = vrot.slane %v216, 1
        %v263 = vrot.slane %v217, 1
        %v264 = vsel %vm261, %v262, %v263
        %v265 = vrot.slane %v218, 1
        %v266 = vrot.slane %v219, 1
        %v267 = vsel %vm261, %v265, %v266
        %v268 = vrot.slane %v220, 1
        %v269 = vrot.slane %v221, 1
        %v270 = vsel %vm261, %v268, %v269
        %v271 = vrot.slane %v222, 1
        %v272 = vrot.slane %v223, 1
        %v273 = vsel %vm261, %v271, %v272
        %v274 = vrot.slane %v224, 1
        %v275 = vrot.slane %v225, 1
        %v276 = vsel %vm261, %v274, %v275
        %v277 = vrot.slane %v226, 1
        %v278 = vrot.slane %v227, 1
        %v279 = vsel %vm261, %v277, %v278
        %v280 = vrot.slane %v228, 1
        %v281 = vrot.slane %v229, 1
        %v282 = vsel %vm261, %v280, %v281
        %v283 = vrot.slane %v230, 1
        %v284 = vrot.slane %v231, 1
        %v285 = vsel %vm261, %v283, %v284
        %vm286 = vcmask 31744
        %v287 = vsel %vm286, %v264, 0
        %v289 = vsel %vm286, %v267, 0
        %v291 = vsel %vm286, %v270, 0
        %v293 = vsel %vm286, %v273, 0
        %v295 = vsel %vm286, %v276, 0
        %v297 = vsel %vm286, %v279, 0
        %v299 = vsel %vm286, %v282, 0
        %v301 = vsel %vm286, %v285, 0
        %vm303 = vcmask 1043456
        %v305 = vsel %vm303, %v237, 0
        %307 = vmatprep.subr.mxu0 0.0
        %308 = vmatpush1.msra.mxu0 %v305
        %309 = vmatprep.subr.mxu0 0.0
        %310 = vmatpush1.msra.mxu0 0.0
        %311 = vmatprep.subr.mxu0 0.0
        %312 = vmatpush1.msra.mxu0 0.0
        %313 = vmatprep.subr.mxu0 0.0
        %314 = vmatpush1.msra.mxu0 0.0
        %315 = vmatprep.subr.mxu0 0.0
        %316 = vmatpush1.msra.mxu0 0.0
        %317 = vmatprep.subr.mxu0 0.0
        %318 = vmatpush1.msra.mxu0 0.0
        %319 = vmatprep.subr.mxu0 0.0
        %320 = vmatpush1.msra.mxu0 0.0
        %321 = vmatprep.subr.mxu0 0.0
        %322 = vmatpush1.msra.mxu0 0.0
        %323 = vmatprep.subr.mxu0 0.0
        %324 = vmatpush1.msra.mxu0 0.0
        %325 = vmatprep.subr.mxu0 0.0
        %326 = vmatpush1.msra.mxu0 0.0
        %327 = vmatprep.subr.mxu0 0.0
        %328 = vmatpush1.msra.mxu0 0.0
        %329 = vmatprep.subr.mxu0 0.0
        %330 = vmatpush1.msra.mxu0 0.0
        %331 = vmatprep.subr.mxu0 0.0
        %332 = vmatpush1.msra.mxu0 0.0
        %333 = vmatprep.subr.mxu0 0.0
        %334 = vmatpush1.msra.mxu0 0.0
        %335 = vmatprep.subr.mxu0 0.0
        %336 = vmatpush1.msra.mxu0 0.0
        %337 = vmatprep.subr.mxu0 0.0
        %338 = vmatpush1.msra.mxu0 0.0
        %339 = vmatprep.subr.mxu0 0.0
        %340 = vmatpush1.msra.mxu0 0.0
        %341 = vmatprep.subr.mxu0 0.0
        %342 = vmatpush1.msra.mxu0 0.0
        %343 = vmatprep.subr.mxu0 0.0
        %344 = vmatpush1.msra.mxu0 0.0
        %345 = vmatprep.subr.mxu0 0.0
        %346 = vmatpush1.msra.mxu0 0.0
        %347 = vmatprep.subr.mxu0 0.0
        %348 = vmatpush1.msra.mxu0 0.0
        %349 = vmatprep.subr.mxu0 0.0
        %350 = vmatpush1.msra.mxu0 0.0
        %351 = vmatprep.subr.mxu0 0.0
        %352 = vmatpush1.msra.mxu0 0.0
        %353 = vmatprep.subr.mxu0 0.0
        %354 = vmatpush1.msra.mxu0 0.0
        %355 = vmatprep.subr.mxu0 0.0
        %356 = vmatpush1.msra.mxu0 0.0
        %357 = vmatprep.subr.mxu0 0.0
        %358 = vmatpush1.msra.mxu0 0.0
        %359 = vmatprep.subr.mxu0 0.0
        %360 = vmatpush1.msra.mxu0 0.0
        %361 = vmatprep.subr.mxu0 0.0
        %362 = vmatpush1.msra.mxu0 0.0
        %363 = vmatprep.subr.mxu0 0.0
        %364 = vmatpush1.msra.mxu0 0.0
        %365 = vmatprep.subr.mxu0 0.0
        %366 = vmatpush1.msra.mxu0 0.0
        %367 = vmatprep.subr.mxu0 0.0
        %368 = vmatpush1.msra.mxu0 0.0
        %369 = vmatprep.subr.mxu0 0.0
        %370 = vmatpush1.msra.mxu0 0.0
        %371 = vmatprep.mubr.f32.mxu0 0.0
        %372 = vmatmul.mubr.f32.gmra.mrb[0].mxu0 %v287
        %v373 = vpop.f32.mrb[0].mxu0
        %v374 = vadd.f32 0.0, %v373
        %v375 = vpop.f32.mrb[0].mxu0
        %376 = vmatprep.mubr.f32.mxu0 0.0
        %377 = vmatmul.mubr.f32.gmra.mrb[0].mxu0 %v289
        %v378 = vpop.f32.mrb[0].mxu0
        %v379 = vadd.f32 0.0, %v378
        %v380 = vpop.f32.mrb[0].mxu0
        %381 = vmatprep.mubr.f32.mxu0 0.0
        %382 = vmatmul.mubr.f32.gmra.mrb[0].mxu0 %v291
        %v383 = vpop.f32.mrb[0].mxu0
        %v384 = vadd.f32 0.0, %v383
        %v385 = vpop.f32.mrb[0].mxu0
        %386 = vmatprep.mubr.f32.mxu0 0.0
        %387 = vmatmul.mubr.f32.gmra.mrb[0].mxu0 %v293
        %v388 = vpop.f32.mrb[0].mxu0
        %v389 = vadd.f32 0.0, %v388
        %v390 = vpop.f32.mrb[0].mxu0
        %391 = vmatprep.mubr.f32.mxu0 0.0
        %392 = vmatmul.mubr.f32.gmra.mrb[0].mxu0 %v295
        %v393 = vpop.f32.mrb[0].mxu0
        %v394 = vadd.f32 0.0, %v393
        %v395 = vpop.f32.mrb[0].mxu0
        %396 = vmatprep.mubr.f32.mxu0 0.0
        %397 = vmatmul.mubr.f32.gmra.mrb[0].mxu0 %v297
        %v398 = vpop.f32.mrb[0].mxu0
        %v399 = vadd.f32 0.0, %v398
        %v400 = vpop.f32.mrb[0].mxu0
        %401 = vmatprep.mubr.f32.mxu0 0.0
        %402 = vmatmul.mubr.f32.gmra.mrb[0].mxu0 %v299
        %v403 = vpop.f32.mrb[0].mxu0
        %v404 = vadd.f32 0.0, %v403
        %v405 = vpop.f32.mrb[0].mxu0
        %406 = vmatprep.mubr.f32.mxu0 0.0
        %407 = vmatmul.mubr.f32.gmra.mrb[0].mxu0 %v301
        %v408 = vpop.f32.mrb[0].mxu0
        %v409 = vadd.f32 0.0, %v408
        %v410 = vpop.f32.mrb[0].mxu0
        %411 = vdwg.mxu0
        %v412 = vsel %vm286, %v216, 0
        %v414 = vsel %vm286, %v218, 0
        %v416 = vsel %vm286, %v220, 0
        %v418 = vsel %vm286, %v222, 0
        %v420 = vsel %vm286, %v224, 0
        %v422 = vsel %vm286, %v226, 0
        %v424 = vsel %vm286, %v228, 0
        %v426 = vsel %vm286, %v230, 0
        %v429 = vsel %vm303, %v236, 0
        %431 = vmatprep.subr.mxu0 0.0
        %432 = vmatpush1.msra.mxu0 %v429
        %433 = vmatprep.subr.mxu0 0.0
        %434 = vmatpush1.msra.mxu0 0.0
        %435 = vmatprep.subr.mxu0 0.0
        %436 = vmatpush1.msra.mxu0 0.0
        %437 = vmatprep.subr.mxu0 0.0
        %438 = vmatpush1.msra.mxu0 0.0
        %439 = vmatprep.subr.mxu0 0.0
        %440 = vmatpush1.msra.mxu0 0.0
        %441 = vmatprep.subr.mxu0 0.0
        %442 = vmatpush1.msra.mxu0 0.0
        %443 = vmatprep.subr.mxu0 0.0
        %444 = vmatpush1.msra.mxu0 0.0
        %445 = vmatprep.subr.mxu0 0.0
        %446 = vmatpush1.msra.mxu0 0.0
        %447 = vmatprep.subr.mxu0 0.0
        %448 = vmatpush1.msra.mxu0 0.0
        %449 = vmatprep.subr.mxu0 0.0
        %450 = vmatpush1.msra.mxu0 0.0
        %451 = vmatprep.subr.mxu0 0.0
        %452 = vmatpush1.msra.mxu0 0.0
        %453 = vmatprep.subr.mxu0 0.0
        %454 = vmatpush1.msra.mxu0 0.0
        %455 = vmatprep.subr.mxu0 0.0
        %456 = vmatpush1.msra.mxu0 0.0
        %457 = vmatprep.subr.mxu0 0.0
        %458 = vmatpush1.msra.mxu0 0.0
        %459 = vmatprep.subr.mxu0 0.0
        %460 = vmatpush1.msra.mxu0 0.0
        %461 = vmatprep.subr.mxu0 0.0
        %462 = vmatpush1.msra.mxu0 0.0
        %463 = vmatprep.subr.mxu0 0.0
        %464 = vmatpush1.msra.mxu0 0.0
        %465 = vmatprep.subr.mxu0 0.0
        %466 = vmatpush1.msra.mxu0 0.0
        %467 = vmatprep.subr.mxu0 0.0
        %468 = vmatpush1.msra.mxu0 0.0
        %469 = vmatprep.subr.mxu0 0.0
        %470 = vmatpush1.msra.mxu0 0.0
        %471 = vmatprep.subr.mxu0 0.0
        %472 = vmatpush1.msra.mxu0 0.0
        %473 = vmatprep.subr.mxu0 0.0
        %474 = vmatpush1.msra.mxu0 0.0
        %475 = vmatprep.subr.mxu0 0.0
        %476 = vmatpush1.msra.mxu0 0.0
        %477 = vmatprep.subr.mxu0 0.0
        %478 = vmatpush1.msra.mxu0 0.0
        %479 = vmatprep.subr.mxu0 0.0
        %480 = vmatpush1.msra.mxu0 0.0
        %481 = vmatprep.subr.mxu0 0.0
        %482 = vmatpush1.msra.mxu0 0.0
        %483 = vmatprep.subr.mxu0 0.0
        %484 = vmatpush1.msra.mxu0 0.0
        %485 = vmatprep.subr.mxu0 0.0
        %486 = vmatpush1.msra.mxu0 0.0
        %487 = vmatprep.subr.mxu0 0.0
        %488 = vmatpush1.msra.mxu0 0.0
        %489 = vmatprep.subr.mxu0 0.0
        %490 = vmatpush1.msra.mxu0 0.0
        %491 = vmatprep.subr.mxu0 0.0
        %492 = vmatpush1.msra.mxu0 0.0
        %493 = vmatprep.subr.mxu0 0.0
        %494 = vmatpush1.msra.mxu0 0.0
        %495 = vmatprep.mubr.f32.mxu0 0.0
        %496 = vmatmul.mubr.f32.gmra.mrb[0].mxu0 %v412
        %v497 = vpop.f32.mrb[0].mxu0
        %v498 = vadd.f32 %v374, %v497
        %v499 = vpop.f32.mrb[0].mxu0
        %500 = vmatprep.mubr.f32.mxu0 0.0
        %501 = vmatmul.mubr.f32.gmra.mrb[0].mxu0 %v414
        %v502 = vpop.f32.mrb[0].mxu0
        %v503 = vadd.f32 %v379, %v502
        %v504 = vpop.f32.mrb[0].mxu0
        %505 = vmatprep.mubr.f32.mxu0 0.0
        %506 = vmatmul.mubr.f32.gmra.mrb[0].mxu0 %v416
        %v507 = vpop.f32.mrb[0].mxu0
        %v508 = vadd.f32 %v384, %v507
        %v509 = vpop.f32.mrb[0].mxu0
        %510 = vmatprep.mubr.f32.mxu0 0.0
        %511 = vmatmul.mubr.f32.gmra.mrb[0].mxu0 %v418
        %v512 = vpop.f32.mrb[0].mxu0
        %v513 = vadd.f32 %v389, %v512
        %v514 = vpop.f32.mrb[0].mxu0
        %515 = vmatprep.mubr.f32.mxu0 0.0
        %516 = vmatmul.mubr.f32.gmra.mrb[0].mxu0 %v420
        %v517 = vpop.f32.mrb[0].mxu0
        %v518 = vadd.f32 %v394, %v517
        %v519 = vpop.f32.mrb[0].mxu0
        %520 = vmatprep.mubr.f32.mxu0 0.0
        %521 = vmatmul.mubr.f32.gmra.mrb[0].mxu0 %v422
        %v522 = vpop.f32.mrb[0].mxu0
        %v523 = vadd.f32 %v399, %v522
        %v524 = vpop.f32.mrb[0].mxu0
        %525 = vmatprep.mubr.f32.mxu0 0.0
        %526 = vmatmul.mubr.f32.gmra.mrb[0].mxu0 %v424
        %v527 = vpop.f32.mrb[0].mxu0
        %v528 = vadd.f32 %v404, %v527
        %v529 = vpop.f32.mrb[0].mxu0
        %530 = vmatprep.mubr.f32.mxu0 0.0
        %531 = vmatmul.mubr.f32.gmra.mrb[0].mxu0 %v426
        %v532 = vpop.f32.mrb[0].mxu0
        %v533 = vadd.f32 %v409, %v532
        %v534 = vpop.f32.mrb[0].mxu0
        %535 = vdwg.mxu0
        %vm536 = vcmask 1045504
        %v537 = vrot.slane %v216, 2
        %v538 = vrot.slane %v217, 2
        %v539 = vsel %vm536, %v537, %v538
        %v540 = vrot.slane %v218, 2
        %v541 = vrot.slane %v219, 2
        %v542 = vsel %vm536, %v540, %v541
        %v543 = vrot.slane %v220, 2
        %v544 = vrot.slane %v221, 2
        %v545 = vsel %vm536, %v543, %v544
        %v546 = vrot.slane %v222, 2
        %v547 = vrot.slane %v223, 2
        %v548 = vsel %vm536, %v546, %v547
        %v549 = vrot.slane %v224, 2
        %v550 = vrot.slane %v225, 2
        %v551 = vsel %vm536, %v549, %v550
        %v552 = vrot.slane %v226, 2
        %v553 = vrot.slane %v227, 2
        %v554 = vsel %vm536, %v552, %v553
        %v555 = vrot.slane %v228, 2
        %v556 = vrot.slane %v229, 2
        %v557 = vsel %vm536, %v555, %v556
        %v558 = vrot.slane %v230, 2
        %v559 = vrot.slane %v231, 2
        %v560 = vsel %vm536, %v558, %v559
        %v561 = vsel %vm286, %v539, 0
        %v563 = vsel %vm286, %v542, 0
        %v565 = vsel %vm286, %v545, 0
        %v567 = vsel %vm286, %v548, 0
        %v569 = vsel %vm286, %v551, 0
        %v571 = vsel %vm286, %v554, 0
        %v573 = vsel %vm286, %v557, 0
        %v575 = vsel %vm286, %v560, 0
        %v578 = vsel %vm303, %v238, 0
        %580 = vmatprep.subr.mxu0 0.0
        %581 = vmatpush1.msra.mxu0 %v578
        %582 = vmatprep.subr.mxu0 0.0
        %583 = vmatpush1.msra.mxu0 0.0
        %584 = vmatprep.subr.mxu0 0.0
        %585 = vmatpush1.msra.mxu0 0.0
        %586 = vmatprep.subr.mxu0 0.0
        %587 = vmatpush1.msra.mxu0 0.0
        %588 = vmatprep.subr.mxu0 0.0
        %589 = vmatpush1.msra.mxu0 0.0
        %590 = vmatprep.subr.mxu0 0.0
        %591 = vmatpush1.msra.mxu0 0.0
        %592 = vmatprep.subr.mxu0 0.0
        %593 = vmatpush1.msra.mxu0 0.0
        %594 = vmatprep.subr.mxu0 0.0
        %595 = vmatpush1.msra.mxu0 0.0
        %596 = vmatprep.subr.mxu0 0.0
        %597 = vmatpush1.msra.mxu0 0.0
        %598 = vmatprep.subr.mxu0 0.0
        %599 = vmatpush1.msra.mxu0 0.0
        %600 = vmatprep.subr.mxu0 0.0
        %601 = vmatpush1.msra.mxu0 0.0
        %602 = vmatprep.subr.mxu0 0.0
        %603 = vmatpush1.msra.mxu0 0.0
        %604 = vmatprep.subr.mxu0 0.0
        %605 = vmatpush1.msra.mxu0 0.0
        %606 = vmatprep.subr.mxu0 0.0
        %607 = vmatpush1.msra.mxu0 0.0
        %608 = vmatprep.subr.mxu0 0.0
        %609 = vmatpush1.msra.mxu0 0.0
        %610 = vmatprep.subr.mxu0 0.0
        %611 = vmatpush1.msra.mxu0 0.0
        %612 = vmatprep.subr.mxu0 0.0
        %613 = vmatpush1.msra.mxu0 0.0
        %614 = vmatprep.subr.mxu0 0.0
        %615 = vmatpush1.msra.mxu0 0.0
        %616 = vmatprep.subr.mxu0 0.0
        %617 = vmatpush1.msra.mxu0 0.0
        %618 = vmatprep.subr.mxu0 0.0
        %619 = vmatpush1.msra.mxu0 0.0
        %620 = vmatprep.subr.mxu0 0.0
        %621 = vmatpush1.msra.mxu0 0.0
        %622 = vmatprep.subr.mxu0 0.0
        %623 = vmatpush1.msra.mxu0 0.0
        %624 = vmatprep.subr.mxu0 0.0
        %625 = vmatpush1.msra.mxu0 0.0
        %626 = vmatprep.subr.mxu0 0.0
        %627 = vmatpush1.msra.mxu0 0.0
        %628 = vmatprep.subr.mxu0 0.0
        %629 = vmatpush1.msra.mxu0 0.0
        %630 = vmatprep.subr.mxu0 0.0
        %631 = vmatpush1.msra.mxu0 0.0
        %632 = vmatprep.subr.mxu0 0.0
        %633 = vmatpush1.msra.mxu0 0.0
        %634 = vmatprep.subr.mxu0 0.0
        %635 = vmatpush1.msra.mxu0 0.0
        %636 = vmatprep.subr.mxu0 0.0
        %637 = vmatpush1.msra.mxu0 0.0
        %638 = vmatprep.subr.mxu0 0.0
        %639 = vmatpush1.msra.mxu0 0.0
        %640 = vmatprep.subr.mxu0 0.0
        %641 = vmatpush1.msra.mxu0 0.0
        %642 = vmatprep.subr.mxu0 0.0
        %643 = vmatpush1.msra.mxu0 0.0
        %644 = vmatprep.mubr.f32.mxu0 0.0
        %645 = vmatmul.mubr.f32.gmra.mrb[0].mxu0 %v561
        %v646 = vpop.f32.mrb[0].mxu0
        %v647 = vadd.f32 0.0, %v646
        %v648 = vpop.f32.mrb[0].mxu0
        %649 = vmatprep.mubr.f32.mxu0 0.0
        %650 = vmatmul.mubr.f32.gmra.mrb[0].mxu0 %v563
        %v651 = vpop.f32.mrb[0].mxu0
        %v652 = vadd.f32 0.0, %v651
        %v653 = vpop.f32.mrb[0].mxu0
        %654 = vmatprep.mubr.f32.mxu0 0.0
        %655 = vmatmul.mubr.f32.gmra.mrb[0].mxu0 %v565
        %v656 = vpop.f32.mrb[0].mxu0
        %v657 = vadd.f32 0.0, %v656
        %v658 = vpop.f32.mrb[0].mxu0
        %659 = vmatprep.mubr.f32.mxu0 0.0
        %660 = vmatmul.mubr.f32.gmra.mrb[0].mxu0 %v567
        %v661 = vpop.f32.mrb[0].mxu0
        %v662 = vadd.f32 0.0, %v661
        %v663 = vpop.f32.mrb[0].mxu0
        %664 = vmatprep.mubr.f32.mxu0 0.0
        %665 = vmatmul.mubr.f32.gmra.mrb[0].mxu0 %v569
        %v666 = vpop.f32.mrb[0].mxu0
        %v667 = vadd.f32 0.0, %v666
        %v668 = vpop.f32.mrb[0].mxu0
        %669 = vmatprep.mubr.f32.mxu0 0.0
        %670 = vmatmul.mubr.f32.gmra.mrb[0].mxu0 %v571
        %v671 = vpop.f32.mrb[0].mxu0
        %v672 = vadd.f32 0.0, %v671
        %v673 = vpop.f32.mrb[0].mxu0
        %674 = vmatprep.mubr.f32.mxu0 0.0
        %675 = vmatmul.mubr.f32.gmra.mrb[0].mxu0 %v573
        %v676 = vpop.f32.mrb[0].mxu0
        %v677 = vadd.f32 0.0, %v676
        %v678 = vpop.f32.mrb[0].mxu0
        %679 = vmatprep.mubr.f32.mxu0 0.0
        %680 = vmatmul.mubr.f32.gmra.mrb[0].mxu0 %v575
        %v681 = vpop.f32.mrb[0].mxu0
        %v682 = vadd.f32 0.0, %v681
        %v683 = vpop.f32.mrb[0].mxu0
        %684 = vdwg.mxu0
        %v685 = vadd.f32 %v498, %v647
        %v686 = vadd.f32 %v503, %v652
        %v687 = vadd.f32 %v508, %v657
        %v688 = vadd.f32 %v513, %v662
        %v689 = vadd.f32 %v518, %v667
        %v690 = vadd.f32 %v523, %v672
        %v691 = vadd.f32 %v528, %v677
        %v692 = vadd.f32 %v533, %v682
        %v694 = vsel %vm286, %v232, 0
        %v697 = vsel %vm303, %v239, 0
        %699 = vmatprep.subr.mxu0 0.0
        %700 = vmatpush1.msra.mxu0 %v697
        %701 = vmatprep.subr.mxu0 0.0
        %702 = vmatpush1.msra.mxu0 0.0
        %703 = vmatprep.subr.mxu0 0.0
        %704 = vmatpush1.msra.mxu0 0.0
        %705 = vmatprep.subr.mxu0 0.0
        %706 = vmatpush1.msra.mxu0 0.0
        %707 = vmatprep.subr.mxu0 0.0
        %708 = vmatpush1.msra.mxu0 0.0
        %709 = vmatprep.subr.mxu0 0.0
        %710 = vmatpush1.msra.mxu0 0.0
        %711 = vmatprep.subr.mxu0 0.0
        %712 = vmatpush1.msra.mxu0 0.0
        %713 = vmatprep.subr.mxu0 0.0
        %714 = vmatpush1.msra.mxu0 0.0
        %715 = vmatprep.subr.mxu0 0.0
        %716 = vmatpush1.msra.mxu0 0.0
        %717 = vmatprep.subr.mxu0 0.0
        %718 = vmatpush1.msra.mxu0 0.0
        %719 = vmatprep.subr.mxu0 0.0
        %720 = vmatpush1.msra.mxu0 0.0
        %721 = vmatprep.subr.mxu0 0.0
        %722 = vmatpush1.msra.mxu0 0.0
        %723 = vmatprep.subr.mxu0 0.0
        %724 = vmatpush1.msra.mxu0 0.0
        %725 = vmatprep.subr.mxu0 0.0
        %726 = vmatpush1.msra.mxu0 0.0
        %727 = vmatprep.subr.mxu0 0.0
        %728 = vmatpush1.msra.mxu0 0.0
        %729 = vmatprep.subr.mxu0 0.0
        %730 = vmatpush1.msra.mxu0 0.0
        %731 = vmatprep.subr.mxu0 0.0
        %732 = vmatpush1.msra.mxu0 0.0
        %733 = vmatprep.subr.mxu0 0.0
        %734 = vmatpush1.msra.mxu0 0.0
        %735 = vmatprep.subr.mxu0 0.0
        %736 = vmatpush1.msra.mxu0 0.0
        %737 = vmatprep.subr.mxu0 0.0
        %738 = vmatpush1.msra.mxu0 0.0
        %739 = vmatprep.subr.mxu0 0.0
        %740 = vmatpush1.msra.mxu0 0.0
        %741 = vmatprep.subr.mxu0 0.0
        %742 = vmatpush1.msra.mxu0 0.0
        %743 = vmatprep.subr.mxu0 0.0
        %744 = vmatpush1.msra.mxu0 0.0
        %745 = vmatprep.subr.mxu0 0.0
        %746 = vmatpush1.msra.mxu0 0.0
        %747 = vmatprep.subr.mxu0 0.0
        %748 = vmatpush1.msra.mxu0 0.0
        %749 = vmatprep.subr.mxu0 0.0
        %750 = vmatpush1.msra.mxu0 0.0
        %751 = vmatprep.subr.mxu0 0.0
        %752 = vmatpush1.msra.mxu0 0.0
        %753 = vmatprep.subr.mxu0 0.0
        %754 = vmatpush1.msra.mxu0 0.0
        %755 = vmatprep.subr.mxu0 0.0
        %756 = vmatpush1.msra.mxu0 0.0
        %757 = vmatprep.subr.mxu0 0.0
        %758 = vmatpush1.msra.mxu0 0.0
        %759 = vmatprep.subr.mxu0 0.0
        %760 = vmatpush1.msra.mxu0 0.0
        %761 = vmatprep.subr.mxu0 0.0
        %762 = vmatpush1.msra.mxu0 0.0
        %763 = vmatprep.mubr.f32.mxu0 0.0
        %764 = vmatmul.mubr.f32.gmra.mrb[0].mxu0 %v414
        %v765 = vpop.f32.mrb[0].mxu0
        %v766 = vadd.f32 0.0, %v765
        %v767 = vpop.f32.mrb[0].mxu0
        %768 = vmatprep.mubr.f32.mxu0 0.0
        %769 = vmatmul.mubr.f32.gmra.mrb[0].mxu0 %v416
        %v770 = vpop.f32.mrb[0].mxu0
        %v771 = vadd.f32 0.0, %v770
        %v772 = vpop.f32.mrb[0].mxu0
        %773 = vmatprep.mubr.f32.mxu0 0.0
        %774 = vmatmul.mubr.f32.gmra.mrb[0].mxu0 %v418
        %v775 = vpop.f32.mrb[0].mxu0
        %v776 = vadd.f32 0.0, %v775
        %v777 = vpop.f32.mrb[0].mxu0
        %778 = vmatprep.mubr.f32.mxu0 0.0
        %779 = vmatmul.mubr.f32.gmra.mrb[0].mxu0 %v420
        %v780 = vpop.f32.mrb[0].mxu0
        %v781 = vadd.f32 0.0, %v780
        %v782 = vpop.f32.mrb[0].mxu0
        %783 = vmatprep.mubr.f32.mxu0 0.0
        %784 = vmatmul.mubr.f32.gmra.mrb[0].mxu0 %v422
        %v785 = vpop.f32.mrb[0].mxu0
        %v786 = vadd.f32 0.0, %v785
        %v787 = vpop.f32.mrb[0].mxu0
        %788 = vmatprep.mubr.f32.mxu0 0.0
        %789 = vmatmul.mubr.f32.gmra.mrb[0].mxu0 %v424
        %v790 = vpop.f32.mrb[0].mxu0
        %v791 = vadd.f32 0.0, %v790
        %v792 = vpop.f32.mrb[0].mxu0
        %793 = vmatprep.mubr.f32.mxu0 0.0
        %794 = vmatmul.mubr.f32.gmra.mrb[0].mxu0 %v426
        %v795 = vpop.f32.mrb[0].mxu0
        %v796 = vadd.f32 0.0, %v795
        %v797 = vpop.f32.mrb[0].mxu0
        %798 = vmatprep.mubr.f32.mxu0 0.0
        %799 = vmatmul.mubr.f32.gmra.mrb[0].mxu0 %v694
        %v800 = vpop.f32.mrb[0].mxu0
        %v801 = vadd.f32 0.0, %v800
        %v802 = vpop.f32.mrb[0].mxu0
        %803 = vdwg.mxu0
        %v804 = vadd.f32 %v685, %v766
        %v805 = vadd.f32 %v686, %v771
        %v806 = vadd.f32 %v687, %v776
        %v807 = vadd.f32 %v688, %v781
        %v808 = vadd.f32 %v689, %v786
        %v809 = vadd.f32 %v690, %v791
        %v810 = vadd.f32 %v691, %v796
        %v811 = vadd.f32 %v692, %v801
        %v813 = vrot.slane %v232, 1
        %v814 = vrot.slane %v233, 1
        %v815 = vsel %vm261, %v813, %v814
        %v816 = vsel %vm286, %v815, 0
        %v819 = vsel %vm303, %v240, 0
        %821 = vmatprep.subr.mxu0 0.0
        %822 = vmatpush1.msra.mxu0 %v819
        %823 = vmatprep.subr.mxu0 0.0
        %824 = vmatpush1.msra.mxu0 0.0
        %825 = vmatprep.subr.mxu0 0.0
        %826 = vmatpush1.msra.mxu0 0.0
        %827 = vmatprep.subr.mxu0 0.0
        %828 = vmatpush1.msra.mxu0 0.0
        %829 = vmatprep.subr.mxu0 0.0
        %830 = vmatpush1.msra.mxu0 0.0
        %831 = vmatprep.subr.mxu0 0.0
        %832 = vmatpush1.msra.mxu0 0.0
        %833 = vmatprep.subr.mxu0 0.0
        %834 = vmatpush1.msra.mxu0 0.0
        %835 = vmatprep.subr.mxu0 0.0
        %836 = vmatpush1.msra.mxu0 0.0
        %837 = vmatprep.subr.mxu0 0.0
        %838 = vmatpush1.msra.mxu0 0.0
        %839 = vmatprep.subr.mxu0 0.0
        %840 = vmatpush1.msra.mxu0 0.0
        %841 = vmatprep.subr.mxu0 0.0
        %842 = vmatpush1.msra.mxu0 0.0
        %843 = vmatprep.subr.mxu0 0.0
        %844 = vmatpush1.msra.mxu0 0.0
        %845 = vmatprep.subr.mxu0 0.0
        %846 = vmatpush1.msra.mxu0 0.0
        %847 = vmatprep.subr.mxu0 0.0
        %848 = vmatpush1.msra.mxu0 0.0
        %849 = vmatprep.subr.mxu0 0.0
        %850 = vmatpush1.msra.mxu0 0.0
        %851 = vmatprep.subr.mxu0 0.0
        %852 = vmatpush1.msra.mxu0 0.0
        %853 = vmatprep.subr.mxu0 0.0
        %854 = vmatpush1.msra.mxu0 0.0
        %855 = vmatprep.subr.mxu0 0.0
        %856 = vmatpush1.msra.mxu0 0.0
        %857 = vmatprep.subr.mxu0 0.0
        %858 = vmatpush1.msra.mxu0 0.0
        %859 = vmatprep.subr.mxu0 0.0
        %860 = vmatpush1.msra.mxu0 0.0
        %861 = vmatprep.subr.mxu0 0.0
        %862 = vmatpush1.msra.mxu0 0.0
        %863 = vmatprep.subr.mxu0 0.0
        %864 = vmatpush1.msra.mxu0 0.0
        %865 = vmatprep.subr.mxu0 0.0
        %866 = vmatpush1.msra.mxu0 0.0
        %867 = vmatprep.subr.mxu0 0.0
        %868 = vmatpush1.msra.mxu0 0.0
        %869 = vmatprep.subr.mxu0 0.0
        %870 = vmatpush1.msra.mxu0 0.0
        %871 = vmatprep.subr.mxu0 0.0
        %872 = vmatpush1.msra.mxu0 0.0
        %873 = vmatprep.subr.mxu0 0.0
        %874 = vmatpush1.msra.mxu0 0.0
        %875 = vmatprep.subr.mxu0 0.0
        %876 = vmatpush1.msra.mxu0 0.0
        %877 = vmatprep.subr.mxu0 0.0
        %878 = vmatpush1.msra.mxu0 0.0
        %879 = vmatprep.subr.mxu0 0.0
        %880 = vmatpush1.msra.mxu0 0.0
        %881 = vmatprep.subr.mxu0 0.0
        %882 = vmatpush1.msra.mxu0 0.0
        %883 = vmatprep.subr.mxu0 0.0
        %884 = vmatpush1.msra.mxu0 0.0
        %885 = vmatprep.mubr.f32.mxu0 0.0
        %886 = vmatmul.mubr.f32.gmra.mrb[0].mxu0 %v289
        %v887 = vpop.f32.mrb[0].mxu0
        %v888 = vadd.f32 0.0, %v887
        %v889 = vpop.f32.mrb[0].mxu0
        %890 = vmatprep.mubr.f32.mxu0 0.0
        %891 = vmatmul.mubr.f32.gmra.mrb[0].mxu0 %v291
        %v892 = vpop.f32.mrb[0].mxu0
        %v893 = vadd.f32 0.0, %v892
        %v894 = vpop.f32.mrb[0].mxu0
        %895 = vmatprep.mubr.f32.mxu0 0.0
        %896 = vmatmul.mubr.f32.gmra.mrb[0].mxu0 %v293
        %v897 = vpop.f32.mrb[0].mxu0
        %v898 = vadd.f32 0.0, %v897
        %v899 = vpop.f32.mrb[0].mxu0
        %900 = vmatprep.mubr.f32.mxu0 0.0
        %901 = vmatmul.mubr.f32.gmra.mrb[0].mxu0 %v295
        %v902 = vpop.f32.mrb[0].mxu0
        %v903 = vadd.f32 0.0, %v902
        %v904 = vpop.f32.mrb[0].mxu0
        %905 = vmatprep.mubr.f32.mxu0 0.0
        %906 = vmatmul.mubr.f32.gmra.mrb[0].mxu0 %v297
        %v907 = vpop.f32.mrb[0].mxu0
        %v908 = vadd.f32 0.0, %v907
        %v909 = vpop.f32.mrb[0].mxu0
        %910 = vmatprep.mubr.f32.mxu0 0.0
        %911 = vmatmul.mubr.f32.gmra.mrb[0].mxu0 %v299
        %v912 = vpop.f32.mrb[0].mxu0
        %v913 = vadd.f32 0.0, %v912
        %v914 = vpop.f32.mrb[0].mxu0
        %915 = vmatprep.mubr.f32.mxu0 0.0
        %916 = vmatmul.mubr.f32.gmra.mrb[0].mxu0 %v301
        %v917 = vpop.f32.mrb[0].mxu0
        %v918 = vadd.f32 0.0, %v917
        %v919 = vpop.f32.mrb[0].mxu0
        %920 = vmatprep.mubr.f32.mxu0 0.0
        %921 = vmatmul.mubr.f32.gmra.mrb[0].mxu0 %v816
        %v922 = vpop.f32.mrb[0].mxu0
        %v923 = vadd.f32 0.0, %v922
        %v924 = vpop.f32.mrb[0].mxu0
        %925 = vdwg.mxu0
        %v926 = vadd.f32 %v804, %v888
        %v927 = vadd.f32 %v805, %v893
        %v928 = vadd.f32 %v806, %v898
        %v929 = vadd.f32 %v807, %v903
        %v930 = vadd.f32 %v808, %v908
        %v931 = vadd.f32 %v809, %v913
        %v932 = vadd.f32 %v810, %v918
        %v933 = vadd.f32 %v811, %v923
        %v934 = vrot.slane %v232, 2
        %v935 = vrot.slane %v233, 2
        %v936 = vsel %vm536, %v934, %v935
        %v937 = vsel %vm286, %v936, 0
        %v940 = vsel %vm303, %v241, 0
        %942 = vmatprep.subr.mxu0 0.0
        %943 = vmatpush1.msra.mxu0 %v940
        %944 = vmatprep.subr.mxu0 0.0
        %945 = vmatpush1.msra.mxu0 0.0
        %946 = vmatprep.subr.mxu0 0.0
        %947 = vmatpush1.msra.mxu0 0.0
        %948 = vmatprep.subr.mxu0 0.0
        %949 = vmatpush1.msra.mxu0 0.0
        %950 = vmatprep.subr.mxu0 0.0
        %951 = vmatpush1.msra.mxu0 0.0
        %952 = vmatprep.subr.mxu0 0.0
        %953 = vmatpush1.msra.mxu0 0.0
        %954 = vmatprep.subr.mxu0 0.0
        %955 = vmatpush1.msra.mxu0 0.0
        %956 = vmatprep.subr.mxu0 0.0
        %957 = vmatpush1.msra.mxu0 0.0
        %958 = vmatprep.subr.mxu0 0.0
        %959 = vmatpush1.msra.mxu0 0.0
        %960 = vmatprep.subr.mxu0 0.0
        %961 = vmatpush1.msra.mxu0 0.0
        %962 = vmatprep.subr.mxu0 0.0
        %963 = vmatpush1.msra.mxu0 0.0
        %964 = vmatprep.subr.mxu0 0.0
        %965 = vmatpush1.msra.mxu0 0.0
        %966 = vmatprep.subr.mxu0 0.0
        %967 = vmatpush1.msra.mxu0 0.0
        %968 = vmatprep.subr.mxu0 0.0
        %969 = vmatpush1.msra.mxu0 0.0
        %970 = vmatprep.subr.mxu0 0.0
        %971 = vmatpush1.msra.mxu0 0.0
        %972 = vmatprep.subr.mxu0 0.0
        %973 = vmatpush1.msra.mxu0 0.0
        %974 = vmatprep.subr.mxu0 0.0
        %975 = vmatpush1.msra.mxu0 0.0
        %976 = vmatprep.subr.mxu0 0.0
        %977 = vmatpush1.msra.mxu0 0.0
        %978 = vmatprep.subr.mxu0 0.0
        %979 = vmatpush1.msra.mxu0 0.0
        %980 = vmatprep.subr.mxu0 0.0
        %981 = vmatpush1.msra.mxu0 0.0
        %982 = vmatprep.subr.mxu0 0.0
        %983 = vmatpush1.msra.mxu0 0.0
        %984 = vmatprep.subr.mxu0 0.0
        %985 = vmatpush1.msra.mxu0 0.0
        %986 = vmatprep.subr.mxu0 0.0
        %987 = vmatpush1.msra.mxu0 0.0
        %988 = vmatprep.subr.mxu0 0.0
        %989 = vmatpush1.msra.mxu0 0.0
        %990 = vmatprep.subr.mxu0 0.0
        %991 = vmatpush1.msra.mxu0 0.0
        %992 = vmatprep.subr.mxu0 0.0
        %993 = vmatpush1.msra.mxu0 0.0
        %994 = vmatprep.subr.mxu0 0.0
        %995 = vmatpush1.msra.mxu0 0.0
        %996 = vmatprep.subr.mxu0 0.0
        %997 = vmatpush1.msra.mxu0 0.0
        %998 = vmatprep.subr.mxu0 0.0
        %999 = vmatpush1.msra.mxu0 0.0
        %1000 = vmatprep.subr.mxu0 0.0
        %1001 = vmatpush1.msra.mxu0 0.0
        %1002 = vmatprep.subr.mxu0 0.0
        %1003 = vmatpush1.msra.mxu0 0.0
        %1004 = vmatprep.subr.mxu0 0.0
        %1005 = vmatpush1.msra.mxu0 0.0
        %1006 = vmatprep.mubr.f32.mxu0 0.0
        %1007 = vmatmul.mubr.f32.gmra.mrb[0].mxu0 %v563
        %v1008 = vpop.f32.mrb[0].mxu0
        %v1009 = vadd.f32 0.0, %v1008
        %v1010 = vpop.f32.mrb[0].mxu0
        %1011 = vmatprep.mubr.f32.mxu0 0.0
        %1012 = vmatmul.mubr.f32.gmra.mrb[0].mxu0 %v565
        %v1013 = vpop.f32.mrb[0].mxu0
        %v1014 = vadd.f32 0.0, %v1013
        %v1015 = vpop.f32.mrb[0].mxu0
        %1016 = vmatprep.mubr.f32.mxu0 0.0
        %1017 = vmatmul.mubr.f32.gmra.mrb[0].mxu0 %v567
        %v1018 = vpop.f32.mrb[0].mxu0
        %v1019 = vadd.f32 0.0, %v1018
        %v1020 = vpop.f32.mrb[0].mxu0
        %1021 = vmatprep.mubr.f32.mxu0 0.0
        %1022 = vmatmul.mubr.f32.gmra.mrb[0].mxu0 %v569
        %v1023 = vpop.f32.mrb[0].mxu0
        %v1024 = vadd.f32 0.0, %v1023
        %v1025 = vpop.f32.mrb[0].mxu0
        %1026 = vmatprep.mubr.f32.mxu0 0.0
        %1027 = vmatmul.mubr.f32.gmra.mrb[0].mxu0 %v571
        %v1028 = vpop.f32.mrb[0].mxu0
        %v1029 = vadd.f32 0.0, %v1028
        %v1030 = vpop.f32.mrb[0].mxu0
        %1031 = vmatprep.mubr.f32.mxu0 0.0
        %1032 = vmatmul.mubr.f32.gmra.mrb[0].mxu0 %v573
        %v1033 = vpop.f32.mrb[0].mxu0
        %v1034 = vadd.f32 0.0, %v1033
        %v1035 = vpop.f32.mrb[0].mxu0
        %1036 = vmatprep.mubr.f32.mxu0 0.0
        %1037 = vmatmul.mubr.f32.gmra.mrb[0].mxu0 %v575
        %v1038 = vpop.f32.mrb[0].mxu0
        %v1039 = vadd.f32 0.0, %v1038
        %v1040 = vpop.f32.mrb[0].mxu0
        %1041 = vmatprep.mubr.f32.mxu0 0.0
        %1042 = vmatmul.mubr.f32.gmra.mrb[0].mxu0 %v937
        %v1043 = vpop.f32.mrb[0].mxu0
        %v1044 = vadd.f32 0.0, %v1043
        %v1045 = vpop.f32.mrb[0].mxu0
        %1046 = vdwg.mxu0
        %v1047 = vadd.f32 %v926, %v1009
        %v1048 = vadd.f32 %v927, %v1014
        %v1049 = vadd.f32 %v928, %v1019
        %v1050 = vadd.f32 %v929, %v1024
        %v1051 = vadd.f32 %v930, %v1029
        %v1052 = vadd.f32 %v931, %v1034
        %v1053 = vadd.f32 %v932, %v1039
        %v1054 = vadd.f32 %v933, %v1044
        %v1056 = vsel %vm286, %v234, 0
        %v1059 = vsel %vm303, %v242, 0
        %1061 = vmatprep.subr.mxu0 0.0
        %1062 = vmatpush1.msra.mxu0 %v1059
        %1063 = vmatprep.subr.mxu0 0.0
        %1064 = vmatpush1.msra.mxu0 0.0
        %1065 = vmatprep.subr.mxu0 0.0
        %1066 = vmatpush1.msra.mxu0 0.0
        %1067 = vmatprep.subr.mxu0 0.0
        %1068 = vmatpush1.msra.mxu0 0.0
        %1069 = vmatprep.subr.mxu0 0.0
        %1070 = vmatpush1.msra.mxu0 0.0
        %1071 = vmatprep.subr.mxu0 0.0
        %1072 = vmatpush1.msra.mxu0 0.0
        %1073 = vmatprep.subr.mxu0 0.0
        %1074 = vmatpush1.msra.mxu0 0.0
        %1075 = vmatprep.subr.mxu0 0.0
        %1076 = vmatpush1.msra.mxu0 0.0
        %1077 = vmatprep.subr.mxu0 0.0
        %1078 = vmatpush1.msra.mxu0 0.0
        %1079 = vmatprep.subr.mxu0 0.0
        %1080 = vmatpush1.msra.mxu0 0.0
        %1081 = vmatprep.subr.mxu0 0.0
        %1082 = vmatpush1.msra.mxu0 0.0
        %1083 = vmatprep.subr.mxu0 0.0
        %1084 = vmatpush1.msra.mxu0 0.0
        %1085 = vmatprep.subr.mxu0 0.0
        %1086 = vmatpush1.msra.mxu0 0.0
        %1087 = vmatprep.subr.mxu0 0.0
        %1088 = vmatpush1.msra.mxu0 0.0
        %1089 = vmatprep.subr.mxu0 0.0
        %1090 = vmatpush1.msra.mxu0 0.0
        %1091 = vmatprep.subr.mxu0 0.0
        %1092 = vmatpush1.msra.mxu0 0.0
        %1093 = vmatprep.subr.mxu0 0.0
        %1094 = vmatpush1.msra.mxu0 0.0
        %1095 = vmatprep.subr.mxu0 0.0
        %1096 = vmatpush1.msra.mxu0 0.0
        %1097 = vmatprep.subr.mxu0 0.0
        %1098 = vmatpush1.msra.mxu0 0.0
        %1099 = vmatprep.subr.mxu0 0.0
        %1100 = vmatpush1.msra.mxu0 0.0
        %1101 = vmatprep.subr.mxu0 0.0
        %1102 = vmatpush1.msra.mxu0 0.0
        %1103 = vmatprep.subr.mxu0 0.0
        %1104 = vmatpush1.msra.mxu0 0.0
        %1105 = vmatprep.subr.mxu0 0.0
        %1106 = vmatpush1.msra.mxu0 0.0
        %1107 = vmatprep.subr.mxu0 0.0
        %1108 = vmatpush1.msra.mxu0 0.0
        %1109 = vmatprep.subr.mxu0 0.0
        %1110 = vmatpush1.msra.mxu0 0.0
        %1111 = vmatprep.subr.mxu0 0.0
        %1112 = vmatpush1.msra.mxu0 0.0
        %1113 = vmatprep.subr.mxu0 0.0
        %1114 = vmatpush1.msra.mxu0 0.0
        %1115 = vmatprep.subr.mxu0 0.0
        %1116 = vmatpush1.msra.mxu0 0.0
        %1117 = vmatprep.subr.mxu0 0.0
        %1118 = vmatpush1.msra.mxu0 0.0
        %1119 = vmatprep.subr.mxu0 0.0
        %1120 = vmatpush1.msra.mxu0 0.0
        %1121 = vmatprep.subr.mxu0 0.0
        %1122 = vmatpush1.msra.mxu0 0.0
        %1123 = vmatprep.subr.mxu0 0.0
        %1124 = vmatpush1.msra.mxu0 0.0
        %1125 = vmatprep.mubr.f32.mxu0 0.0
        %1126 = vmatmul.mubr.f32.gmra.mrb[0].mxu0 %v416
        %v1127 = vpop.f32.mrb[0].mxu0
        %v1128 = vadd.f32 0.0, %v1127
        %v1129 = vpop.f32.mrb[0].mxu0
        %1130 = vmatprep.mubr.f32.mxu0 0.0
        %1131 = vmatmul.mubr.f32.gmra.mrb[0].mxu0 %v418
        %v1132 = vpop.f32.mrb[0].mxu0
        %v1133 = vadd.f32 0.0, %v1132
        %v1134 = vpop.f32.mrb[0].mxu0
        %1135 = vmatprep.mubr.f32.mxu0 0.0
        %1136 = vmatmul.mubr.f32.gmra.mrb[0].mxu0 %v420
        %v1137 = vpop.f32.mrb[0].mxu0
        %v1138 = vadd.f32 0.0, %v1137
        %v1139 = vpop.f32.mrb[0].mxu0
        %1140 = vmatprep.mubr.f32.mxu0 0.0
        %1141 = vmatmul.mubr.f32.gmra.mrb[0].mxu0 %v422
        %v1142 = vpop.f32.mrb[0].mxu0
        %v1143 = vadd.f32 0.0, %v1142
        %v1144 = vpop.f32.mrb[0].mxu0
        %1145 = vmatprep.mubr.f32.mxu0 0.0
        %1146 = vmatmul.mubr.f32.gmra.mrb[0].mxu0 %v424
        %v1147 = vpop.f32.mrb[0].mxu0
        %v1148 = vadd.f32 0.0, %v1147
        %v1149 = vpop.f32.mrb[0].mxu0
        %1150 = vmatprep.mubr.f32.mxu0 0.0
        %1151 = vmatmul.mubr.f32.gmra.mrb[0].mxu0 %v426
        %v1152 = vpop.f32.mrb[0].mxu0
        %v1153 = vadd.f32 0.0, %v1152
        %v1154 = vpop.f32.mrb[0].mxu0
        %1155 = vmatprep.mubr.f32.mxu0 0.0
        %1156 = vmatmul.mubr.f32.gmra.mrb[0].mxu0 %v694
        %v1157 = vpop.f32.mrb[0].mxu0
        %v1158 = vadd.f32 0.0, %v1157
        %v1159 = vpop.f32.mrb[0].mxu0
        %1160 = vmatprep.mubr.f32.mxu0 0.0
        %1161 = vmatmul.mubr.f32.gmra.mrb[0].mxu0 %v1056
        %v1162 = vpop.f32.mrb[0].mxu0
        %v1163 = vadd.f32 0.0, %v1162
        %v1164 = vpop.f32.mrb[0].mxu0
        %1165 = vdwg.mxu0
        %v1166 = vadd.f32 %v1047, %v1128
        %v1167 = vadd.f32 %v1048, %v1133
        %v1168 = vadd.f32 %v1049, %v1138
        %v1169 = vadd.f32 %v1050, %v1143
        %v1170 = vadd.f32 %v1051, %v1148
        %v1171 = vadd.f32 %v1052, %v1153
        %v1172 = vadd.f32 %v1053, %v1158
        %v1173 = vadd.f32 %v1054, %v1163
        %v1175 = vrot.slane %v234, 1
        %v1176 = vrot.slane %v235, 1
        %v1177 = vsel %vm261, %v1175, %v1176
        %v1178 = vsel %vm286, %v1177, 0
        %v1181 = vsel %vm303, %v243, 0
        %1183 = vmatprep.subr.mxu0 0.0
        %1184 = vmatpush1.msra.mxu0 %v1181
        %1185 = vmatprep.subr.mxu0 0.0
        %1186 = vmatpush1.msra.mxu0 0.0
        %1187 = vmatprep.subr.mxu0 0.0
        %1188 = vmatpush1.msra.mxu0 0.0
        %1189 = vmatprep.subr.mxu0 0.0
        %1190 = vmatpush1.msra.mxu0 0.0
        %1191 = vmatprep.subr.mxu0 0.0
        %1192 = vmatpush1.msra.mxu0 0.0
        %1193 = vmatprep.subr.mxu0 0.0
        %1194 = vmatpush1.msra.mxu0 0.0
        %1195 = vmatprep.subr.mxu0 0.0
        %1196 = vmatpush1.msra.mxu0 0.0
        %1197 = vmatprep.subr.mxu0 0.0
        %1198 = vmatpush1.msra.mxu0 0.0
        %1199 = vmatprep.subr.mxu0 0.0
        %1200 = vmatpush1.msra.mxu0 0.0
        %1201 = vmatprep.subr.mxu0 0.0
        %1202 = vmatpush1.msra.mxu0 0.0
        %1203 = vmatprep.subr.mxu0 0.0
        %1204 = vmatpush1.msra.mxu0 0.0
        %1205 = vmatprep.subr.mxu0 0.0
        %1206 = vmatpush1.msra.mxu0 0.0
        %1207 = vmatprep.subr.mxu0 0.0
        %1208 = vmatpush1.msra.mxu0 0.0
        %1209 = vmatprep.subr.mxu0 0.0
        %1210 = vmatpush1.msra.mxu0 0.0
        %1211 = vmatprep.subr.mxu0 0.0
        %1212 = vmatpush1.msra.mxu0 0.0
        %1213 = vmatprep.subr.mxu0 0.0
        %1214 = vmatpush1.msra.mxu0 0.0
        %1215 = vmatprep.subr.mxu0 0.0
        %1216 = vmatpush1.msra.mxu0 0.0
        %1217 = vmatprep.subr.mxu0 0.0
        %1218 = vmatpush1.msra.mxu0 0.0
        %1219 = vmatprep.subr.mxu0 0.0
        %1220 = vmatpush1.msra.mxu0 0.0
        %1221 = vmatprep.subr.mxu0 0.0
        %1222 = vmatpush1.msra.mxu0 0.0
        %1223 = vmatprep.subr.mxu0 0.0
        %1224 = vmatpush1.msra.mxu0 0.0
        %1225 = vmatprep.subr.mxu0 0.0
        %1226 = vmatpush1.msra.mxu0 0.0
        %1227 = vmatprep.subr.mxu0 0.0
        %1228 = vmatpush1.msra.mxu0 0.0
        %1229 = vmatprep.subr.mxu0 0.0
        %1230 = vmatpush1.msra.mxu0 0.0
        %1231 = vmatprep.subr.mxu0 0.0
        %1232 = vmatpush1.msra.mxu0 0.0
        %1233 = vmatprep.subr.mxu0 0.0
        %1234 = vmatpush1.msra.mxu0 0.0
        %1235 = vmatprep.subr.mxu0 0.0
        %1236 = vmatpush1.msra.mxu0 0.0
        %1237 = vmatprep.subr.mxu0 0.0
        %1238 = vmatpush1.msra.mxu0 0.0
        %1239 = vmatprep.subr.mxu0 0.0
        %1240 = vmatpush1.msra.mxu0 0.0
        %1241 = vmatprep.subr.mxu0 0.0
        %1242 = vmatpush1.msra.mxu0 0.0
        %1243 = vmatprep.subr.mxu0 0.0
        %1244 = vmatpush1.msra.mxu0 0.0
        %1245 = vmatprep.subr.mxu0 0.0
        %1246 = vmatpush1.msra.mxu0 0.0
        %1247 = vmatprep.mubr.f32.mxu0 0.0
        %1248 = vmatmul.mubr.f32.gmra.mrb[0].mxu0 %v291
        %v1249 = vpop.f32.mrb[0].mxu0
        %v1250 = vadd.f32 0.0, %v1249
        %v1251 = vpop.f32.mrb[0].mxu0
        %1252 = vmatprep.mubr.f32.mxu0 0.0
        %1253 = vmatmul.mubr.f32.gmra.mrb[0].mxu0 %v293
        %v1254 = vpop.f32.mrb[0].mxu0
        %v1255 = vadd.f32 0.0, %v1254
        %v1256 = vpop.f32.mrb[0].mxu0
        %1257 = vmatprep.mubr.f32.mxu0 0.0
        %1258 = vmatmul.mubr.f32.gmra.mrb[0].mxu0 %v295
        %v1259 = vpop.f32.mrb[0].mxu0
        %v1260 = vadd.f32 0.0, %v1259
        %v1261 = vpop.f32.mrb[0].mxu0
        %1262 = vmatprep.mubr.f32.mxu0 0.0
        %1263 = vmatmul.mubr.f32.gmra.mrb[0].mxu0 %v297
        %v1264 = vpop.f32.mrb[0].mxu0
        %v1265 = vadd.f32 0.0, %v1264
        %v1266 = vpop.f32.mrb[0].mxu0
        %1267 = vmatprep.mubr.f32.mxu0 0.0
        %1268 = vmatmul.mubr.f32.gmra.mrb[0].mxu0 %v299
        %v1269 = vpop.f32.mrb[0].mxu0
        %v1270 = vadd.f32 0.0, %v1269
        %v1271 = vpop.f32.mrb[0].mxu0
        %1272 = vmatprep.mubr.f32.mxu0 0.0
        %1273 = vmatmul.mubr.f32.gmra.mrb[0].mxu0 %v301
        %v1274 = vpop.f32.mrb[0].mxu0
        %v1275 = vadd.f32 0.0, %v1274
        %v1276 = vpop.f32.mrb[0].mxu0
        %1277 = vmatprep.mubr.f32.mxu0 0.0
        %1278 = vmatmul.mubr.f32.gmra.mrb[0].mxu0 %v816
        %v1279 = vpop.f32.mrb[0].mxu0
        %v1280 = vadd.f32 0.0, %v1279
        %v1281 = vpop.f32.mrb[0].mxu0
        %1282 = vmatprep.mubr.f32.mxu0 0.0
        %1283 = vmatmul.mubr.f32.gmra.mrb[0].mxu0 %v1178
        %v1284 = vpop.f32.mrb[0].mxu0
        %v1285 = vadd.f32 0.0, %v1284
        %v1286 = vpop.f32.mrb[0].mxu0
        %1287 = vdwg.mxu0
        %v1288 = vadd.f32 %v1166, %v1250
        %v1289 = vadd.f32 %v1167, %v1255
        %v1290 = vadd.f32 %v1168, %v1260
        %v1291 = vadd.f32 %v1169, %v1265
        %v1292 = vadd.f32 %v1170, %v1270
        %v1293 = vadd.f32 %v1171, %v1275
        %v1294 = vadd.f32 %v1172, %v1280
        %v1295 = vadd.f32 %v1173, %v1285
        %v1296 = vrot.slane %v234, 2
        %v1297 = vrot.slane %v235, 2
        %v1298 = vsel %vm536, %v1296, %v1297
        %v1299 = vsel %vm286, %v1298, 0
        %v1302 = vsel %vm303, %v244, 0
        %1304 = vmatprep.subr.mxu0 0.0
        %1305 = vmatpush1.msra.mxu0 %v1302
        %1306 = vmatprep.subr.mxu0 0.0
        %1307 = vmatpush1.msra.mxu0 0.0
        %1308 = vmatprep.subr.mxu0 0.0
        %1309 = vmatpush1.msra.mxu0 0.0
        %1310 = vmatprep.subr.mxu0 0.0
        %1311 = vmatpush1.msra.mxu0 0.0
        %1312 = vmatprep.subr.mxu0 0.0
        %1313 = vmatpush1.msra.mxu0 0.0
        %1314 = vmatprep.subr.mxu0 0.0
        %1315 = vmatpush1.msra.mxu0 0.0
        %1316 = vmatprep.subr.mxu0 0.0
        %1317 = vmatpush1.msra.mxu0 0.0
        %1318 = vmatprep.subr.mxu0 0.0
        %1319 = vmatpush1.msra.mxu0 0.0
        %1320 = vmatprep.subr.mxu0 0.0
        %1321 = vmatpush1.msra.mxu0 0.0
        %1322 = vmatprep.subr.mxu0 0.0
        %1323 = vmatpush1.msra.mxu0 0.0
        %1324 = vmatprep.subr.mxu0 0.0
        %1325 = vmatpush1.msra.mxu0 0.0
        %1326 = vmatprep.subr.mxu0 0.0
        %1327 = vmatpush1.msra.mxu0 0.0
        %1328 = vmatprep.subr.mxu0 0.0
        %1329 = vmatpush1.msra.mxu0 0.0
        %1330 = vmatprep.subr.mxu0 0.0
        %1331 = vmatpush1.msra.mxu0 0.0
        %1332 = vmatprep.subr.mxu0 0.0
        %1333 = vmatpush1.msra.mxu0 0.0
        %1334 = vmatprep.subr.mxu0 0.0
        %1335 = vmatpush1.msra.mxu0 0.0
        %1336 = vmatprep.subr.mxu0 0.0
        %1337 = vmatpush1.msra.mxu0 0.0
        %1338 = vmatprep.subr.mxu0 0.0
        %1339 = vmatpush1.msra.mxu0 0.0
        %1340 = vmatprep.subr.mxu0 0.0
        %1341 = vmatpush1.msra.mxu0 0.0
        %1342 = vmatprep.subr.mxu0 0.0
        %1343 = vmatpush1.msra.mxu0 0.0
        %1344 = vmatprep.subr.mxu0 0.0
        %1345 = vmatpush1.msra.mxu0 0.0
        %1346 = vmatprep.subr.mxu0 0.0
        %1347 = vmatpush1.msra.mxu0 0.0
        %1348 = vmatprep.subr.mxu0 0.0
        %1349 = vmatpush1.msra.mxu0 0.0
        %1350 = vmatprep.subr.mxu0 0.0
        %1351 = vmatpush1.msra.mxu0 0.0
        %1352 = vmatprep.subr.mxu0 0.0
        %1353 = vmatpush1.msra.mxu0 0.0
        %1354 = vmatprep.subr.mxu0 0.0
        %1355 = vmatpush1.msra.mxu0 0.0
        %1356 = vmatprep.subr.mxu0 0.0
        %1357 = vmatpush1.msra.mxu0 0.0
        %1358 = vmatprep.subr.mxu0 0.0
        %1359 = vmatpush1.msra.mxu0 0.0
        %1360 = vmatprep.subr.mxu0 0.0
        %1361 = vmatpush1.msra.mxu0 0.0
        %1362 = vmatprep.subr.mxu0 0.0
        %1363 = vmatpush1.msra.mxu0 0.0
        %1364 = vmatprep.subr.mxu0 0.0
        %1365 = vmatpush1.msra.mxu0 0.0
        %1366 = vmatprep.subr.mxu0 0.0
        %1367 = vmatpush1.msra.mxu0 0.0
        %1368 = vmatprep.mubr.f32.mxu0 0.0
        %1369 = vmatmul.mubr.f32.gmra.mrb[0].mxu0 %v565
        %v1370 = vpop.f32.mrb[0].mxu0
        %v1371 = vadd.f32 0.0, %v1370
        %v1372 = vpop.f32.mrb[0].mxu0
        %1373 = vmatprep.mubr.f32.mxu0 0.0
        %1374 = vmatmul.mubr.f32.gmra.mrb[0].mxu0 %v567
        %v1375 = vpop.f32.mrb[0].mxu0
        %v1376 = vadd.f32 0.0, %v1375
        %v1377 = vpop.f32.mrb[0].mxu0
        %1378 = vmatprep.mubr.f32.mxu0 0.0
        %1379 = vmatmul.mubr.f32.gmra.mrb[0].mxu0 %v569
        %v1380 = vpop.f32.mrb[0].mxu0
        %v1381 = vadd.f32 0.0, %v1380
        %v1382 = vpop.f32.mrb[0].mxu0
        %1383 = vmatprep.mubr.f32.mxu0 0.0
        %1384 = vmatmul.mubr.f32.gmra.mrb[0].mxu0 %v571
        %v1385 = vpop.f32.mrb[0].mxu0
        %v1386 = vadd.f32 0.0, %v1385
        %v1387 = vpop.f32.mrb[0].mxu0
        %1388 = vmatprep.mubr.f32.mxu0 0.0
        %1389 = vmatmul.mubr.f32.gmra.mrb[0].mxu0 %v573
        %v1390 = vpop.f32.mrb[0].mxu0
        %v1391 = vadd.f32 0.0, %v1390
        %v1392 = vpop.f32.mrb[0].mxu0
        %1393 = vmatprep.mubr.f32.mxu0 0.0
        %1394 = vmatmul.mubr.f32.gmra.mrb[0].mxu0 %v575
        %v1395 = vpop.f32.mrb[0].mxu0
        %v1396 = vadd.f32 0.0, %v1395
        %v1397 = vpop.f32.mrb[0].mxu0
        %1398 = vmatprep.mubr.f32.mxu0 0.0
        %1399 = vmatmul.mubr.f32.gmra.mrb[0].mxu0 %v937
        %v1400 = vpop.f32.mrb[0].mxu0
        %v1401 = vadd.f32 0.0, %v1400
        %v1402 = vpop.f32.mrb[0].mxu0
        %1403 = vmatprep.mubr.f32.mxu0 0.0
        %1404 = vmatmul.mubr.f32.gmra.mrb[0].mxu0 %v1299
        %v1405 = vpop.f32.mrb[0].mxu0
        %v1406 = vadd.f32 0.0, %v1405
        %v1407 = vpop.f32.mrb[0].mxu0
        %1408 = vdwg.mxu0
        %v1409 = vadd.f32 %v1288, %v1371
        %v1410 = vadd.f32 %v1289, %v1376
        %v1411 = vadd.f32 %v1290, %v1381
        %v1412 = vadd.f32 %v1291, %v1386
        %v1413 = vadd.f32 %v1292, %v1391
        %v1414 = vadd.f32 %v1293, %v1396
        %v1415 = vadd.f32 %v1294, %v1401
        %v1416 = vadd.f32 %v1295, %v1406
        %v1417 = vld [vmem:[#allocation7] sm:$0x1]
        %v1419 = vlaneseq
        %v1420 = vshrl.u32 %v1419, 7
        %v1421 = vsub.s32 0, %v1420
        %v1422 = vrot.slane %v1417, %v1421
        %v1424 = vadd.f32 %v1409, %v1422
        %v1425 = vadd.f32 %v1410, %v1422
        %v1426 = vadd.f32 %v1411, %v1422
        %v1427 = vadd.f32 %v1412, %v1422
        %v1428 = vadd.f32 %v1413, %v1422
        %v1429 = vadd.f32 %v1414, %v1422
        %v1430 = vadd.f32 %v1415, %v1422
        %v1431 = vadd.f32 %v1416, %v1422
        %vm1432 = vcmask 523264
        %1433 = vst.msk [vmem:[%s215] sm:$0xff] %vm1432, %v1424
        %1434 = vst.msk [vmem:[%s215 + $0x8] sm:$0xff] %vm1432, %v1425
        %1435 = vst.msk [vmem:[%s215 + $0x10] sm:$0xff] %vm1432, %v1426
        %1436 = vst.msk [vmem:[%s215 + $0x18] sm:$0xff] %vm1432, %v1427
        %1437 = vst.msk [vmem:[%s215 + $0x20] sm:$0xff] %vm1432, %v1428
        %1438 = vst.msk [vmem:[%s215 + $0x28] sm:$0xff] %vm1432, %v1429
        %1439 = vst.msk [vmem:[%s215 + $0x30] sm:$0xff] %vm1432, %v1430
        %1440 = vst.msk [vmem:[%s215 + $0x38] sm:$0xff] %vm1432, %v1431
        %s1441 = sand.u32 %s97, 1
        %s1442 = scalar_lea.sflag [#allocation4], %s1441
        %s1443 = sand.u32 %s97, 1
        %s1444 = smul.addr %s1443, 64
        %s1445 = scalar_lea.vmem [#allocation8], %s1444
        // Predicated region
        $region45: #{tpu_custom_call.1} parent=31 // pred_check
          %p1446 = pneg %p107
        $region46: #{tpu_custom_call.1} parent=31 // pred_check_branch
          %1448 = sbr.rel (%p1446) target = $region48
        $region47: #{tpu_custom_call.1} parent=31 // pred_region
          %s1450 = ssub.s32 1024, 1024
          %1451 = vsyncadd %s1442, %s1450
          %s1452 = smul.addr %s21, 8
          %s1453 = smul.addr %s1452, 128
          %s1454 = scalar_lea.hbm %s3, %s1453
          %s1455 = sshll.u32 %s1445, 4
          %s1456 = int_to_ptr.vmem [resolvable:$true] %s1455
          %1461 = dma.vmem_to_hbm [thread:$0]  %s1456, 1024, %s1454, %s1442, 128, 128, 8
        $region48: #{tpu_custom_call.1} parent=31 // pred_fallthru
          _
      $region32: #{tpu_custom_call.1} parent=5 // pred_fallthru
        _
      %p1462 = scmp.le.s32.totalorder 2, %s16
      // Predicated region
      $region49: #{tpu_custom_call.1} parent=5 // pred_check
        %p1463 = pneg %p1462
      $region50: #{tpu_custom_call.1} parent=5 // pred_check_branch
        %1465 = sbr.rel (%p1463) target = $region52
      $region51: #{tpu_custom_call.1} parent=5 // pred_region
        %s1466 = ssub.s32 %s16, 2
        // Predicated region
        $region53: #{tpu_custom_call.1} parent=51 // pred_check
          %p1467 = pneg %p113
        $region54: #{tpu_custom_call.1} parent=51 // pred_check_branch
          %1469 = sbr.rel (%p1467) target = $region56
        $region55: #{tpu_custom_call.1} parent=51 // pred_region
          %s1470 = sand.u32 %s98, 1
          %s1471 = scalar_lea.sflag [#allocation4], %s1470
          %s1472 = sand.u32 %s98, 1
          %s1473 = smul.addr %s1472, 64
          %s1474 = scalar_lea.vmem [#allocation8], %s1473
          %1475 = dma.done %s1471, 1024
        $region56: #{tpu_custom_call.1} parent=51 // pred_fallthru
          _
      $region52: #{tpu_custom_call.1} parent=5 // pred_fallthru
        _
    $region6: #{tpu_custom_call.1} parent=1 // loop_footer
      %s20 = sadd.s32 1, %s16
    $region7: #{tpu_custom_call.1} parent=1 // loop_footer_branch
      %15 = sbr.rel target = $region3
    $region8: #{tpu_custom_call.1} parent=1 // loop_exit
      _
    %1476 = vsyncpa [#allocation3], 1
    %s1477 = scalar_lea.sflag [#allocation3], 1
    %1478 = vsyncpa %s1477, 1
    %1479 = vsyncpa [#allocation6], 1
    %1480 = vsyncpa [#allocation4], 1
    %s1481 = scalar_lea.sflag [#allocation4], 1
    %1482 = vsyncpa %s1481, 1

</llo_original>
